<compile_context>
chip_gen: v6e
topology: v6e:2x2x1
jax: 0.10.0
libtpu: 0.0.40
codegen_flags: <defaults>
</compile_context>

<pallas_src>
import numpy as np
import jax
import jax.numpy as jnp
from jax.experimental import pallas as pl
from jax.experimental.pallas import tpu as pltpu


# ----------------------------- anchor glue (numpy) -----------------------------

def generate_anchor_base(base_size=16, ratios=(0.5, 1, 2), anchor_scales=(8, 16, 32)):
    py = base_size / 2.0
    px = base_size / 2.0
    anchor_base = np.zeros((len(ratios) * len(anchor_scales), 4), dtype=np.float32)
    for i in range(len(ratios)):
        for j in range(len(anchor_scales)):
            h = base_size * anchor_scales[j] * np.sqrt(ratios[i])
            w = base_size * anchor_scales[j] * np.sqrt(1.0 / ratios[i])
            index = i * len(anchor_scales) + j
            anchor_base[index, 0] = py - h / 2.0
            anchor_base[index, 1] = px - w / 2.0
            anchor_base[index, 2] = py + h / 2.0
            anchor_base[index, 3] = px + w / 2.0
    return anchor_base


def _enumerate_shifted_anchor(anchor_base, feat_stride, height, width):
    shift_y = np.arange(0, height * feat_stride, feat_stride)
    shift_x = np.arange(0, width * feat_stride, feat_stride)
    shift_x, shift_y = np.meshgrid(shift_x, shift_y)
    shift = np.stack((shift_y.ravel(), shift_x.ravel(),
                      shift_y.ravel(), shift_x.ravel()), axis=1)
    A = anchor_base.shape[0]
    K = shift.shape[0]
    anchor = anchor_base.reshape((1, A, 4)) + shift.reshape((1, K, 4)).transpose((1, 0, 2))
    anchor = anchor.reshape((K * A, 4)).astype(np.float32)
    return anchor


# ----------------------------- Pallas kernel -----------------------------

def _make_rpn_kernel(H, W, A, B_blk):
    HW = H * W
    M = B_blk * HW

    def rpn_kernel(x_ref, w1_ref, b1_ref, wh_ref, bh_ref, out_ref):
        # x_ref  : (B_blk, H+2, W+2, Cin) padded NHWC activation (bf16), halo kept
        # w1_ref : (9*Cin, CMID_P)        3x3 taps folded into the contraction dim (bf16)
        # b1_ref : (1, CMID_P)            conv1 bias (f32)
        # wh_ref : (CMID_P, 128)          fused heads: [loc(4A) | score(2A) | fg-bg(A) | pad]
        # bh_ref : (1, 128)               fused heads bias (f32)
        # out_ref: (B_blk, HW, 128)       packed lane-dense output (f32)
        Cin = x_ref.shape[3]

        # In-register im2col: 9 shifted bf16 slices concatenated along K.
        # No f32 upcast, no re-cast -> one K = 9*Cin MXU matmul.
        taps = [
            x_ref[:, dy:dy + H, dx:dx + W, :].reshape(M, Cin)
            for dy in range(3) for dx in range(3)
        ]
        xs = jnp.concatenate(taps, axis=-1)                          # (M, 9*Cin) bf16

        h = jnp.dot(xs, w1_ref[...], preferred_element_type=jnp.float32)
        h = jnp.maximum(h + b1_ref[...], 0.0)                        # (M, CMID_P) f32

        # Fused 1x1 heads: single 128-wide MXU matmul.
        heads = jnp.dot(h.astype(jnp.bfloat16), wh_ref[...],
                        preferred_element_type=jnp.float32) + bh_ref[...]   # (M, 128)

        # 2-class softmax fg prob = sigmoid(fg - bg); mask BEFORE exp so the
        # discarded loc/score lanes can never produce inf/NaN.
        col = jax.lax.broadcasted_iota(jnp.int32, heads.shape, 1)
        is_fgp = jnp.logical_and(col >= 6 * A, col < 7 * A)
        z = jnp.where(is_fgp, heads, 0.0)
        sig = pl.reciprocal(1.0 + jnp.exp(-z), approx=False)         # exact; EUP is idle
        out_ref[...] = jnp.where(is_fgp, sig, heads).reshape(B_blk, HW, 128)

    return rpn_kernel


def _pick_batch_block(N, HW):
    """Images per grid step: fill MXU rows (B_blk*HW >= 128) while keeping
    >= 2 grid steps along the parallel batch axis (both v7x TensorCores busy)."""
    divisors = [b for b in range(1, N + 1) if N % b == 0]
    valid = [b for b in divisors if (N // b) >= 2] or divisors
    for b in sorted(valid):
        if b * HW >= 128:
            return b
    return max(valid)


def rpn_forward(x_nchw, params, feat_stride, anchor_base, img_size, scale=1.0,
                batch_block=None):
    """Pallas-backed forward.  Returns (rpn_locs, rpn_scores, rpn_fg_scores, anchor)."""
    N, Cin, H, W = x_nchw.shape
    A = int(anchor_base.shape[0])
    Cmid = int(params["b1"].shape[0])
    HW = H * W
    CMID_P = 128           # mid channels padded to one full lane width
    OUT_P = 128            # packed output lane width (4A + 2A + A = 63 <= 128)
    assert 7 * A <= OUT_P and Cmid <= CMID_P

    anchor = _enumerate_shifted_anchor(np.asarray(anchor_base), feat_stride, H, W)

    B_blk = batch_block if batch_block is not None else _pick_batch_block(N, HW)
    assert N % B_blk == 0

    # ---- activation: NCHW -> padded NHWC, bf16 (1x activation volume in HBM) ----
    x_nhwc = jnp.transpose(x_nchw, (0, 2, 3, 1))
    x_pad = jnp.pad(x_nhwc, ((0, 0), (1, 1), (1, 1), (0, 0))).astype(jnp.bfloat16)

    # ---- conv1 weights: (Cmid, Cin, 3, 3) -> (9*Cin, CMID_P): taps folded into K ----
    w1 = jnp.transpose(params["w1"], (2, 3, 1, 0)).reshape(9 * Cin, Cmid)
    w1 = jnp.pad(w1, ((0, 0), (0, CMID_P - Cmid))).astype(jnp.bfloat16)
    b1 = jnp.pad(params["b1"], (0, CMID_P - Cmid)).reshape(1, CMID_P).astype(jnp.float32)

    # ---- fused head weights: [loc(4A) | score(2A, PyTorch-interleaved bg/fg) | fg-bg(A)] ----
    wloc = params["wloc"][:, :, 0, 0].T           # (Cmid, 4A)
    wsc = params["wscore"][:, :, 0, 0].T          # (Cmid, 2A), channel 2a = bg, 2a+1 = fg
    wdiff = wsc[:, 1::2] - wsc[:, 0::2]           # (Cmid, A)  -> fg - bg logits
    wh = jnp.concatenate([wloc, wsc, wdiff], axis=1)                     # (Cmid, 7A)
    wh = jnp.pad(wh, ((0, CMID_P - Cmid), (0, OUT_P - 7 * A))).astype(jnp.bfloat16)
    bloc = params["bloc"]
    bsc = params["bscore"]
    bdiff = bsc[1::2] - bsc[0::2]
    bh = jnp.concatenate([bloc, bsc, bdiff])
    bh = jnp.pad(bh, (0, OUT_P - 7 * A)).reshape(1, OUT_P).astype(jnp.float32)

    kernel = _make_rpn_kernel(H, W, A, B_blk)

    out = pl.pallas_call(
        kernel,
        out_shape=jax.ShapeDtypeStruct((N, HW, OUT_P), jnp.float32),
        grid_spec=pltpu.PrefetchScalarGridSpec(
            num_scalar_prefetch=0,
            grid=(N // B_blk,),             # >= 2 parallel steps when N >= 2
            in_specs=[
                pl.BlockSpec((B_blk, H + 2, W + 2, Cin), lambda i: (i, 0, 0, 0)),
                pl.BlockSpec((9 * Cin, CMID_P), lambda i: (0, 0)),
                pl.BlockSpec((1, CMID_P), lambda i: (0, 0)),
                pl.BlockSpec((CMID_P, OUT_P), lambda i: (0, 0)),
                pl.BlockSpec((1, OUT_P), lambda i: (0, 0)),
            ],
            out_specs=pl.BlockSpec((B_blk, HW, OUT_P), lambda i: (i, 0, 0)),
        ),
        compiler_params=pltpu.CompilerParams(dimension_semantics=("parallel",)),
    )(x_pad, w1, b1, wh, bh)

    # ---- thin slices only (no stack / re-interleave): PyTorch output conventions ----
    rpn_locs = out[:, :, :4 * A].reshape(N, HW * A, 4)
    rpn_scores = out[:, :, 4 * A:6 * A].reshape(N, HW * A, 2)
    rpn_fg_scores = out[:, :, 6 * A:7 * A].reshape(N, HW * A)

    # TODO(synk): ProposalCreator (rois / roi_indices via NMS) not implemented in Pallas.
    return rpn_locs, rpn_scores, rpn_fg_scores, anchor


# ----------------------------- reference (plain JAX, f32) -----------------------------

def rpn_reference(x_nchw, params):
    dn = ("NCHW", "OIHW", "NCHW")
    h = jax.lax.conv_general_dilated(x_nchw, params["w1"], (1, 1), ((1, 1), (1, 1)),
                                     dimension_numbers=dn)
    h = jax.nn.relu(h + params["b1"][None, :, None, None])
    loc = jax.lax.conv_general_dilated(h, params["wloc"], (1, 1), ((0, 0), (0, 0)),
                                       dimension_numbers=dn) + params["bloc"][None, :, None, None]
    score = jax.lax.conv_general_dilated(h, params["wscore"], (1, 1), ((0, 0), (0, 0)),
                                         dimension_numbers=dn) + params["bscore"][None, :, None, None]
    N, _, H, W = x_nchw.shape
    A = params["wscore"].shape[0] // 2
    rpn_locs = jnp.transpose(loc, (0, 2, 3, 1)).reshape(N, -1, 4)
    rpn_scores_nhwc = jnp.transpose(score, (0, 2, 3, 1))
    sm = jax.nn.softmax(rpn_scores_nhwc.reshape(N, H, W, A, 2), axis=4)
    rpn_fg = sm[..., 1].reshape(N, -1)
    rpn_scores = rpn_scores_nhwc.reshape(N, -1, 2)
    return rpn_locs, rpn_scores, rpn_fg


# ----------------------------- main -----------------------------

if __name__ == "__main__":
    # small shapes consistent with the module; N=4 exercises batch blocking
    # (B_blk=2 -> matmul M=128) while keeping 2 parallel grid steps.
    N, Cin, Cmid, H, W = 4, 16, 32, 8, 8
    ratios = [0.5, 1, 2]
    anchor_scales = [8, 16, 32]
    feat_stride = 16
    anchor_base = generate_anchor_base(ratios=ratios, anchor_scales=anchor_scales)
    A = anchor_base.shape[0]  # 9
    img_size = (H * feat_stride, W * feat_stride)

    key = jax.random.PRNGKey(0)
    kx, k1, k2, k3 = jax.random.split(key, 4)
    x = jax.random.normal(kx, (N, Cin, H, W), dtype=jnp.float32)

    # normal_init(mean=0, std=0.01), biases zeroed — deterministic synthetic params
    params = {
        "w1": 0.01 * jax.random.normal(k1, (Cmid, Cin, 3, 3), dtype=jnp.float32),
        "b1": jnp.zeros((Cmid,), jnp.float32),
        "wscore": 0.01 * jax.random.normal(k2, (2 * A, Cmid, 1, 1), dtype=jnp.float32),
        "bscore": jnp.zeros((2 * A,), jnp.float32),
        "wloc": 0.01 * jax.random.normal(k3, (4 * A, Cmid, 1, 1), dtype=jnp.float32),
        "bloc": jnp.zeros((4 * A,), jnp.float32),
    }

    rpn_locs, rpn_scores, rpn_fg_scores, anchor = rpn_forward(
        x, params, feat_stride, anchor_base, img_size, scale=1.0)
    jax.block_until_ready((rpn_locs, rpn_scores, rpn_fg_scores))

    # correctness check vs. plain-JAX f32 reference (kernel uses bf16 matmul operands)
    ref_locs, ref_scores, ref_fg = rpn_reference(x, params)
    np.testing.assert_allclose(np.asarray(rpn_locs), np.asarray(ref_locs), rtol=2e-2, atol=2e-3)
    np.testing.assert_allclose(np.asarray(rpn_scores), np.asarray(ref_scores), rtol=2e-2, atol=2e-3)
    np.testing.assert_allclose(np.asarray(rpn_fg_scores), np.asarray(ref_fg), rtol=2e-2, atol=5e-3)

    assert rpn_locs.shape == (N, H * W * A, 4)
    assert rpn_scores.shape == (N, H * W * A, 2)
    assert rpn_fg_scores.shape == (N, H * W * A)
    assert anchor.shape == (H * W * A, 4)

    print("KERNEL_OK")
</pallas_src>

<mosaic_0001>
module attributes {stable_mosaic.version = 11 : i64} {
  func.func @rpn_kernel(%arg0: i32, %arg1: memref<2x10x10x16xbf16, #tpu.memory_space<vmem>>, %arg2: memref<144x128xbf16, #tpu.memory_space<vmem>>, %arg3: memref<1x128xf32, #tpu.memory_space<vmem>>, %arg4: memref<128x128xbf16, #tpu.memory_space<vmem>>, %arg5: memref<1x128xf32, #tpu.memory_space<vmem>>, %arg6: memref<2x64x128xf32, #tpu.memory_space<vmem>>) attributes {dimension_semantics = [#tpu.dimension_semantics<parallel>], iteration_bounds = array<i64: 2>, scalar_prefetch = 0 : i64, scratch_operands = 0 : i64, tpu.core_type = #tpu.core_type<tc>, window_params = [{transform_indices = @transform_0, window_bounds = array<i64: 2, 10, 10, 16>}, {pipeline_mode = #tpu.pipeline_mode<synchronous>, transform_indices = @transform_1, window_bounds = array<i64: 144, 128>}, {pipeline_mode = #tpu.pipeline_mode<synchronous>, transform_indices = @transform_2, window_bounds = array<i64: 1, 128>}, {pipeline_mode = #tpu.pipeline_mode<synchronous>, transform_indices = @transform_3, window_bounds = array<i64: 128, 128>}, {pipeline_mode = #tpu.pipeline_mode<synchronous>, transform_indices = @transform_4, window_bounds = array<i64: 1, 128>}, {transform_indices = @transform_5, window_bounds = array<i64: 2, 64, 128>}]} {
    %c0 = arith.constant 0 : index
    %c0_0 = arith.constant 0 : index
    %c0_1 = arith.constant 0 : index
    %c0_2 = arith.constant 0 : index
    %0 = vector.load %arg1[%c0, %c0_0, %c0_1, %c0_2] : memref<2x10x10x16xbf16, #tpu.memory_space<vmem>>, vector<2x8x8x16xbf16>
    %1 = vector.shape_cast %0 : vector<2x8x8x16xbf16> to vector<128x16xbf16>
    %c0_3 = arith.constant 0 : index
    %c0_4 = arith.constant 0 : index
    %c1 = arith.constant 1 : index
    %c0_5 = arith.constant 0 : index
    %2 = vector.load %arg1[%c0_3, %c0_4, %c1, %c0_5] : memref<2x10x10x16xbf16, #tpu.memory_space<vmem>>, vector<2x8x8x16xbf16>
    %3 = vector.shape_cast %2 : vector<2x8x8x16xbf16> to vector<128x16xbf16>
    %c0_6 = arith.constant 0 : index
    %c0_7 = arith.constant 0 : index
    %c2 = arith.constant 2 : index
    %c0_8 = arith.constant 0 : index
    %4 = vector.load %arg1[%c0_6, %c0_7, %c2, %c0_8] : memref<2x10x10x16xbf16, #tpu.memory_space<vmem>>, vector<2x8x8x16xbf16>
    %5 = vector.shape_cast %4 : vector<2x8x8x16xbf16> to vector<128x16xbf16>
    %c0_9 = arith.constant 0 : index
    %c1_10 = arith.constant 1 : index
    %c0_11 = arith.constant 0 : index
    %c0_12 = arith.constant 0 : index
    %6 = vector.load %arg1[%c0_9, %c1_10, %c0_11, %c0_12] : memref<2x10x10x16xbf16, #tpu.memory_space<vmem>>, vector<2x8x8x16xbf16>
    %7 = vector.shape_cast %6 : vector<2x8x8x16xbf16> to vector<128x16xbf16>
    %c0_13 = arith.constant 0 : index
    %c1_14 = arith.constant 1 : index
    %c1_15 = arith.constant 1 : index
    %c0_16 = arith.constant 0 : index
    %8 = vector.load %arg1[%c0_13, %c1_14, %c1_15, %c0_16] : memref<2x10x10x16xbf16, #tpu.memory_space<vmem>>, vector<2x8x8x16xbf16>
    %9 = vector.shape_cast %8 : vector<2x8x8x16xbf16> to vector<128x16xbf16>
    %c0_17 = arith.constant 0 : index
    %c1_18 = arith.constant 1 : index
    %c2_19 = arith.constant 2 : index
    %c0_20 = arith.constant 0 : index
    %10 = vector.load %arg1[%c0_17, %c1_18, %c2_19, %c0_20] : memref<2x10x10x16xbf16, #tpu.memory_space<vmem>>, vector<2x8x8x16xbf16>
    %11 = vector.shape_cast %10 : vector<2x8x8x16xbf16> to vector<128x16xbf16>
    %c0_21 = arith.constant 0 : index
    %c2_22 = arith.constant 2 : index
    %c0_23 = arith.constant 0 : index
    %c0_24 = arith.constant 0 : index
    %12 = vector.load %arg1[%c0_21, %c2_22, %c0_23, %c0_24] : memref<2x10x10x16xbf16, #tpu.memory_space<vmem>>, vector<2x8x8x16xbf16>
    %13 = vector.shape_cast %12 : vector<2x8x8x16xbf16> to vector<128x16xbf16>
    %c0_25 = arith.constant 0 : index
    %c2_26 = arith.constant 2 : index
    %c1_27 = arith.constant 1 : index
    %c0_28 = arith.constant 0 : index
    %14 = vector.load %arg1[%c0_25, %c2_26, %c1_27, %c0_28] : memref<2x10x10x16xbf16, #tpu.memory_space<vmem>>, vector<2x8x8x16xbf16>
    %15 = vector.shape_cast %14 : vector<2x8x8x16xbf16> to vector<128x16xbf16>
    %c0_29 = arith.constant 0 : index
    %c2_30 = arith.constant 2 : index
    %c2_31 = arith.constant 2 : index
    %c0_32 = arith.constant 0 : index
    %16 = vector.load %arg1[%c0_29, %c2_30, %c2_31, %c0_32] : memref<2x10x10x16xbf16, #tpu.memory_space<vmem>>, vector<2x8x8x16xbf16>
    %17 = vector.shape_cast %16 : vector<2x8x8x16xbf16> to vector<128x16xbf16>
    %18 = tpu.concatenate %1, %3, %5, %7, %9, %11, %13, %15, %17 in 1 : vector<128x16xbf16>, vector<128x16xbf16>, vector<128x16xbf16>, vector<128x16xbf16>, vector<128x16xbf16>, vector<128x16xbf16>, vector<128x16xbf16>, vector<128x16xbf16>, vector<128x16xbf16> -> vector<128x144xbf16>
    %c0_33 = arith.constant 0 : index
    %c0_34 = arith.constant 0 : index
    %19 = vector.load %arg2[%c0_33, %c0_34] : memref<144x128xbf16, #tpu.memory_space<vmem>>, vector<144x128xbf16>
    %cst = arith.constant dense<0.000000e+00> : vector<128x128xf32>
    %20 = tpu.matmul %18, %19, %cst {dimension_numbers = #tpu.dot_dimension_numbers<[1], [0], [0], [1], [0, 0, 1, 1], [], []>} : vector<128x144xbf16>, vector<144x128xbf16>, vector<128x128xf32> -> vector<128x128xf32>
    %c0_35 = arith.constant 0 : index
    %c0_36 = arith.constant 0 : index
    %21 = vector.load %arg3[%c0_35, %c0_36] : memref<1x128xf32, #tpu.memory_space<vmem>>, vector<1x128xf32>
    %22 = vector.broadcast %21 : vector<1x128xf32> to vector<128x128xf32>
    %23 = arith.addf %20, %22 : vector<128x128xf32>
    %cst_37 = arith.constant 0.000000e+00 : f32
    %24 = vector.broadcast %cst_37 : f32 to vector<128x128xf32>
    %25 = arith.maximumf %23, %24 : vector<128x128xf32>
    %26 = arith.truncf %25 : vector<128x128xf32> to vector<128x128xbf16>
    %c0_38 = arith.constant 0 : index
    %c0_39 = arith.constant 0 : index
    %27 = vector.load %arg4[%c0_38, %c0_39] : memref<128x128xbf16, #tpu.memory_space<vmem>>, vector<128x128xbf16>
    %cst_40 = arith.constant dense<0.000000e+00> : vector<128x128xf32>
    %28 = tpu.matmul %26, %27, %cst_40 {dimension_numbers = #tpu.dot_dimension_numbers<[1], [0], [0], [1], [0, 0, 1, 1], [], []>} : vector<128x128xbf16>, vector<128x128xbf16>, vector<128x128xf32> -> vector<128x128xf32>
    %c0_41 = arith.constant 0 : index
    %c0_42 = arith.constant 0 : index
    %29 = vector.load %arg5[%c0_41, %c0_42] : memref<1x128xf32, #tpu.memory_space<vmem>>, vector<1x128xf32>
    %30 = vector.broadcast %29 : vector<1x128xf32> to vector<128x128xf32>
    %31 = arith.addf %28, %30 : vector<128x128xf32>
    %32 = tpu.iota {dimensions = array<i32: 1>} : vector<128x128xi32>
    %c54_i32 = arith.constant 54 : i32
    %33 = vector.broadcast %c54_i32 : i32 to vector<128x128xi32>
    %34 = arith.cmpi sge, %32, %33 : vector<128x128xi32>
    %c63_i32 = arith.constant 63 : i32
    %35 = vector.broadcast %c63_i32 : i32 to vector<128x128xi32>
    %36 = arith.cmpi slt, %32, %35 : vector<128x128xi32>
    %37 = arith.andi %34, %36 : vector<128x128xi1>
    %cst_43 = arith.constant 0.000000e+00 : f32
    %38 = vector.broadcast %cst_43 : f32 to vector<128x128xf32>
    %39 = arith.select %37, %31, %38 : vector<128x128xi1>, vector<128x128xf32>
    %cst_44 = arith.constant 0.000000e+00 : f32
    %40 = vector.broadcast %cst_44 : f32 to vector<128x128xf32>
    %41 = arith.subf %40, %39 : vector<128x128xf32>
    %42 = math.exp %41 : vector<128x128xf32>
    %cst_45 = arith.constant 1.000000e+00 : f32
    %43 = vector.broadcast %cst_45 : f32 to vector<128x128xf32>
    %44 = arith.addf %43, %42 : vector<128x128xf32>
    %45 = tpu.reciprocal %44 : vector<128x128xf32> -> vector<128x128xf32>
    %46 = arith.select %37, %45, %31 : vector<128x128xi1>, vector<128x128xf32>
    %47 = vector.shape_cast %46 : vector<128x128xf32> to vector<2x64x128xf32>
    %c0_46 = arith.constant 0 : index
    %c0_47 = arith.constant 0 : index
    %c0_48 = arith.constant 0 : index
    %48 = vector.load %arg6[%c0_46, %c0_47, %c0_48] : memref<2x64x128xf32, #tpu.memory_space<vmem>>, vector<2x64x128xf32>
    tpu.vector_store %arg6[%c0_46, %c0_47, %c0_48], %47 {strides = array<i32>} : memref<2x64x128xf32, #tpu.memory_space<vmem>>, vector<2x64x128xf32>,
    return
  }
  func.func @transform_0(%arg0: i32) -> (i32, i32, i32, i32) {
    %c0_i32 = arith.constant 0 : i32
    %c0_i32_0 = arith.constant 0 : i32
    %c0_i32_1 = arith.constant 0 : i32
    %c0_i32_2 = arith.constant 0 : i32
    return %arg0, %c0_i32, %c0_i32_0, %c0_i32_1 : i32, i32, i32, i32
  }
  func.func @transform_1(%arg0: i32) -> (i32, i32) {
    %c0_i32 = arith.constant 0 : i32
    %c0_i32_0 = arith.constant 0 : i32
    %c0_i32_1 = arith.constant 0 : i32
    return %c0_i32, %c0_i32_0 : i32, i32
  }
  func.func @transform_2(%arg0: i32) -> (i32, i32) {
    %c0_i32 = arith.constant 0 : i32
    %c0_i32_0 = arith.constant 0 : i32
    %c0_i32_1 = arith.constant 0 : i32
    return %c0_i32, %c0_i32_0 : i32, i32
  }
  func.func @transform_3(%arg0: i32) -> (i32, i32) {
    %c0_i32 = arith.constant 0 : i32
    %c0_i32_0 = arith.constant 0 : i32
    %c0_i32_1 = arith.constant 0 : i32
    return %c0_i32, %c0_i32_0 : i32, i32
  }
  func.func @transform_4(%arg0: i32) -> (i32, i32) {
    %c0_i32 = arith.constant 0 : i32
    %c0_i32_0 = arith.constant 0 : i32
    %c0_i32_1 = arith.constant 0 : i32
    return %c0_i32, %c0_i32_0 : i32, i32
  }
  func.func @transform_5(%arg0: i32) -> (i32, i32, i32) {
    %c0_i32 = arith.constant 0 : i32
    %c0_i32_0 = arith.constant 0 : i32
    %c0_i32_1 = arith.constant 0 : i32
    return %arg0, %c0_i32, %c0_i32_0 : i32, i32, i32
  }
}

</mosaic_0001>

<llo_original>
// kernel: tpu_custom_call.1
$region0: #{tpu_custom_call.1}
  #allocation0 [shape = 'u32[]', space=smem, size = 0x4, offset = 0x4, fixed_abs, tag = 'smem constant byte address 0x4 - core index']
  #allocation1 [shape = 'u32[144,128]{1,0:T(1,128)}', space=vmem, size = 0x12000, scoped, tag = 'internal scratch']
  %s0 = inlined_call_operand.vmem [shape: bf16[4,10,10,16], index: 0, kind: input, shape index: {}]
  %s1 = inlined_call_operand.vmem [shape: bf16[144,128], index: 1, kind: input, shape index: {}]
  %s2 = inlined_call_operand.vmem [shape: f32[1,128], index: 2, kind: input, shape index: {}]
  %s3 = inlined_call_operand.vmem [shape: bf16[128,128], index: 3, kind: input, shape index: {}]
  %s4 = inlined_call_operand.vmem [shape: f32[1,128], index: 4, kind: input, shape index: {}]
  %s5 = inlined_call_operand.hbm [shape: f32[4,64,128], index: 5, kind: output, shape index: {}]
  %s6 = sld [smem:[#allocation0]]
  $region53: #{tpu_custom_call.1} parent=0
    _
  %s8 = ssub.s32 1, %s6
  %s9 = scalar_select 0, %s8, %s6
  $region1: #{tpu_custom_call.1} parent=0
    #allocation2 [shape = 'u8[131072]{0}', space=vmem, size = 0x20000, scoped, tag = 'output window, operand 0']
    #allocation3 [shape = 's32[2]{0}', space=sflag, size = 0x8, scoped, tag = 'scoped memory for tpu_custom_call.1']
    %10 = vsyncpa [#allocation3], 0
    %s11 = scalar_lea.sflag [#allocation3], 1
    %12 = vsyncpa %s11, 0
    loop: start=0, step=1, limit=4
    $region2: #{tpu_custom_call.1} parent=1 // loop_pre_header
      _
    $region3: #{tpu_custom_call.1} parent=1 // loop_header
      %s14 = sphi 0, %s18
      %p15 = scmp.ge.s32.totalorder %s14, 4
      %s24 = sphi 0, %s26
      %s27 = sphi 0, %s24
      %s28 = sphi 0, %s27
      %s44 = sphi 0, %s28
      %s48 = sphi 0, %s48
      %s50 = sphi 0, %s48
      %s51 = sphi 0, %s50
      %s65 = sphi 0, %s51
      %s69 = sphi 0, %s69
      %s71 = sphi 0, %s69
      %s72 = sphi 0, %s71
      %s86 = sphi 0, %s72
      %s90 = sphi 0, %s90
      %s92 = sphi 0, %s90
      %s93 = sphi 0, %s92
      %s107 = sphi 0, %s93
      %s111 = sphi 0, %s111
      %s113 = sphi 0, %s111
      %s114 = sphi 0, %s113
      %s128 = sphi 0, %s114
      %s134 = sphi 0, %s136
      %s137 = sphi 0, %s134
      %s138 = sphi 0, %s137
      %s154 = sphi 0, %s138
    $region4: #{tpu_custom_call.1} parent=1 // loop_header_branch
      %17 = sbr.rel (%p15) target = $region8
    $region5: #{tpu_custom_call.1} parent=1 // loop_body
      %s19 = ssub.s32 %s14, 1
      %s20 = ssub.s32 %s14, 2
      %s21 = sadd.s32 %s14, 1
      %s22 = ssub.s32 %s14, %s21
      %p23 = scmp.eq.s32.totalorder %s22, 0
      %s25 = sadd.s32 %s24, 1
      %s26 = scalar_select %p23, %s24, %s25
      %p29 = pneg %p23
      %p30 = scmp.eq.s32.totalorder %s14, 1
      %p31 = por %p29, %p30
      %p32 = scmp.ne.s32.totalorder %s24, %s27
      %p33 = scmp.eq.s32.totalorder %s14, 0
      %p34 = por %p32, %p33
      %p35 = scmp.ne.s32.totalorder %s24, %s27
      %p36 = scmp.eq.s32.totalorder %s19, 1
      %p37 = por %p35, %p36
      %p38 = scmp.ne.s32.totalorder %s27, %s28
      %p39 = scmp.eq.s32.totalorder %s19, 0
      %p40 = por %p38, %p39
      %p41 = scmp.ne.s32.totalorder %s27, %s28
      %p42 = scmp.eq.s32.totalorder %s20, 1
      %p43 = por %p41, %p42
      %p45 = scmp.ne.s32.totalorder %s28, %s44
      %p46 = scmp.eq.s32.totalorder %s20, 0
      %p47 = por %p45, %p46
      %s49 = sadd.s32 %s48, 1
      %p52 = scmp.eq.s32.totalorder %s14, 1
      %p53 = scmp.ne.s32.totalorder %s48, %s50
      %p54 = scmp.eq.s32.totalorder %s14, 0
      %p55 = por %p53, %p54
      %p56 = scmp.ne.s32.totalorder %s48, %s50
      %p57 = scmp.eq.s32.totalorder %s19, 1
      %p58 = por %p56, %p57
      %p59 = scmp.ne.s32.totalorder %s50, %s51
      %p60 = scmp.eq.s32.totalorder %s19, 0
      %p61 = por %p59, %p60
      %p62 = scmp.ne.s32.totalorder %s50, %s51
      %p63 = scmp.eq.s32.totalorder %s20, 1
      %p64 = por %p62, %p63
      %p66 = scmp.ne.s32.totalorder %s51, %s65
      %p67 = scmp.eq.s32.totalorder %s20, 0
      %p68 = por %p66, %p67
      %s70 = sadd.s32 %s69, 1
      %p73 = scmp.eq.s32.totalorder %s14, 1
      %p74 = scmp.ne.s32.totalorder %s69, %s71
      %p75 = scmp.eq.s32.totalorder %s14, 0
      %p76 = por %p74, %p75
      %p77 = scmp.ne.s32.totalorder %s69, %s71
      %p78 = scmp.eq.s32.totalorder %s19, 1
      %p79 = por %p77, %p78
      %p80 = scmp.ne.s32.totalorder %s71, %s72
      %p81 = scmp.eq.s32.totalorder %s19, 0
      %p82 = por %p80, %p81
      %p83 = scmp.ne.s32.totalorder %s71, %s72
      %p84 = scmp.eq.s32.totalorder %s20, 1
      %p85 = por %p83, %p84
      %p87 = scmp.ne.s32.totalorder %s72, %s86
      %p88 = scmp.eq.s32.totalorder %s20, 0
      %p89 = por %p87, %p88
      %s91 = sadd.s32 %s90, 1
      %p94 = scmp.eq.s32.totalorder %s14, 1
      %p95 = scmp.ne.s32.totalorder %s90, %s92
      %p96 = scmp.eq.s32.totalorder %s14, 0
      %p97 = por %p95, %p96
      %p98 = scmp.ne.s32.totalorder %s90, %s92
      %p99 = scmp.eq.s32.totalorder %s19, 1
      %p100 = por %p98, %p99
      %p101 = scmp.ne.s32.totalorder %s92, %s93
      %p102 = scmp.eq.s32.totalorder %s19, 0
      %p103 = por %p101, %p102
      %p104 = scmp.ne.s32.totalorder %s92, %s93
      %p105 = scmp.eq.s32.totalorder %s20, 1
      %p106 = por %p104, %p105
      %p108 = scmp.ne.s32.totalorder %s93, %s107
      %p109 = scmp.eq.s32.totalorder %s20, 0
      %p110 = por %p108, %p109
      %s112 = sadd.s32 %s111, 1
      %p115 = scmp.eq.s32.totalorder %s14, 1
      %p116 = scmp.ne.s32.totalorder %s111, %s113
      %p117 = scmp.eq.s32.totalorder %s14, 0
      %p118 = por %p116, %p117
      %p119 = scmp.ne.s32.totalorder %s111, %s113
      %p120 = scmp.eq.s32.totalorder %s19, 1
      %p121 = por %p119, %p120
      %p122 = scmp.ne.s32.totalorder %s113, %s114
      %p123 = scmp.eq.s32.totalorder %s19, 0
      %p124 = por %p122, %p123
      %p125 = scmp.ne.s32.totalorder %s113, %s114
      %p126 = scmp.eq.s32.totalorder %s20, 1
      %p127 = por %p125, %p126
      %p129 = scmp.ne.s32.totalorder %s114, %s128
      %p130 = scmp.eq.s32.totalorder %s20, 0
      %p131 = por %p129, %p130
      %s132 = ssub.s32 %s14, %s21
      %p133 = scmp.eq.s32.totalorder %s132, 0
      %s135 = sadd.s32 %s134, 1
      %s136 = scalar_select %p133, %s134, %s135
      %p139 = pneg %p133
      %p140 = scmp.eq.s32.totalorder %s14, 1
      %p141 = por %p139, %p140
      %p142 = scmp.ne.s32.totalorder %s134, %s137
      %p143 = scmp.eq.s32.totalorder %s14, 0
      %p144 = por %p142, %p143
      %p145 = scmp.ne.s32.totalorder %s134, %s137
      %p146 = scmp.eq.s32.totalorder %s19, 1
      %p147 = por %p145, %p146
      %p148 = scmp.ne.s32.totalorder %s137, %s138
      %p149 = scmp.eq.s32.totalorder %s19, 0
      %p150 = por %p148, %p149
      %p151 = scmp.ne.s32.totalorder %s137, %s138
      %p152 = scmp.eq.s32.totalorder %s20, 1
      %p153 = por %p151, %p152
      %p155 = scmp.ne.s32.totalorder %s138, %s154
      %p156 = scmp.eq.s32.totalorder %s20, 0
      %p157 = por %p155, %p156
      %p158 = scmp.le.s32.totalorder 1, %s14
      %p159 = scmp.lt.s32.totalorder %s14, 3
      %p160 = pnand %p158, %p159
      %p161 = pneg %p160
      // Predicated region
      $region9: #{tpu_custom_call.1} parent=5 // pred_check
        _
      $region10: #{tpu_custom_call.1} parent=5 // pred_check_branch
        %163 = sbr.rel (%p160) target = $region12
      $region11: #{tpu_custom_call.1} parent=5 // pred_region
        %s164 = ssub.s32 %s14, 1
        // Predicated region
        $region13: #{tpu_custom_call.1} parent=11 // pred_check
          %p165 = pneg %p61
        $region14: #{tpu_custom_call.1} parent=11 // pred_check_branch
          %167 = sbr.rel (%p165) target = $region16
        $region15: #{tpu_custom_call.1} parent=11 // pred_region
          _
        $region16: #{tpu_custom_call.1} parent=11 // pred_fallthru
          _
        // Predicated region
        $region17: #{tpu_custom_call.1} parent=11 // pred_check
          %p168 = pneg %p82
        $region18: #{tpu_custom_call.1} parent=11 // pred_check_branch
          %170 = sbr.rel (%p168) target = $region20
        $region19: #{tpu_custom_call.1} parent=11 // pred_region
          _
        $region20: #{tpu_custom_call.1} parent=11 // pred_fallthru
          _
        // Predicated region
        $region21: #{tpu_custom_call.1} parent=11 // pred_check
          %p171 = pneg %p103
        $region22: #{tpu_custom_call.1} parent=11 // pred_check_branch
          %173 = sbr.rel (%p171) target = $region24
        $region23: #{tpu_custom_call.1} parent=11 // pred_region
          _
        $region24: #{tpu_custom_call.1} parent=11 // pred_fallthru
          _
        // Predicated region
        $region25: #{tpu_custom_call.1} parent=11 // pred_check
          %p174 = pneg %p124
        $region26: #{tpu_custom_call.1} parent=11 // pred_check_branch
          %176 = sbr.rel (%p174) target = $region28
        $region27: #{tpu_custom_call.1} parent=11 // pred_region
          _
        $region28: #{tpu_custom_call.1} parent=11 // pred_fallthru
          _
      $region12: #{tpu_custom_call.1} parent=5 // pred_fallthru
        _
      %p177 = scmp.lt.s32.totalorder %s14, 2
      // Predicated region
      $region29: #{tpu_custom_call.1} parent=5 // pred_check
        %p178 = pneg %p177
      $region30: #{tpu_custom_call.1} parent=5 // pred_check_branch
        %180 = sbr.rel (%p178) target = $region32
      $region31: #{tpu_custom_call.1} parent=5 // pred_region
        // Predicated region
        $region33: #{tpu_custom_call.1} parent=31 // pred_check
          %p181 = pneg %p34
        $region34: #{tpu_custom_call.1} parent=31 // pred_check_branch
          %183 = sbr.rel (%p181) target = $region36
        $region35: #{tpu_custom_call.1} parent=31 // pred_region
          %s184 = smul.u32 2, %s14
          %p185 = scmp.lt.s32.totalorder %s184, 3
          %s186 = scalar_select %p185, %s184, 3
          %s187 = smul.addr %s186, 20
          %s188 = smul.addr %s187, 4
          %s189 = scalar_lea.vmem %s0, %s188
          %s190 = smul.u32 2, %s14
        $region36: #{tpu_custom_call.1} parent=31 // pred_fallthru
          _
      $region32: #{tpu_custom_call.1} parent=5 // pred_fallthru
        _
      %p191 = scmp.le.s32.totalorder 1, %s14
      %p192 = scmp.lt.s32.totalorder %s14, 3
      %p193 = pnand %p191, %p192
      %p194 = pneg %p193
      // Predicated region
      $region37: #{tpu_custom_call.1} parent=5 // pred_check
        _
      $region38: #{tpu_custom_call.1} parent=5 // pred_check_branch
        %196 = sbr.rel (%p193) target = $region40
      $region39: #{tpu_custom_call.1} parent=5 // pred_region
        %s197 = ssub.s32 %s14, 1
        %s198 = smul.u32 2, %s19
        %p199 = scmp.lt.s32.totalorder %s198, 3
        %s200 = scalar_select %p199, %s198, 3
        %s201 = smul.addr %s200, 20
        %s202 = smul.addr %s201, 4
        %s203 = scalar_lea.vmem %s0, %s202
        %p204 = pneg %p40
        %p205 = pneg %p37
        %p206 = pneg %p61
        %p207 = pneg %p58
        %p208 = pneg %p82
        %p209 = pneg %p79
        %p210 = pneg %p103
        %p211 = pneg %p100
        %p212 = pneg %p124
        %p213 = pneg %p121
        %p214 = pneg %p150
        %p215 = pneg %p147
        %s216 = sand.u32 %s137, 1
        %s217 = scalar_lea.sflag [#allocation3], %s216
        %s218 = sand.u32 %s137, 1
        %s219 = smul.addr %s218, 128
        %s220 = scalar_lea.vmem [#allocation2], %s219
        %s221 = smul.u32 2, %s19
        %p222 = scmp.lt.s32.totalorder %s221, 3
        %s223 = scalar_select %p222, %s221, 3
        %s224 = smul.addr %s223, 20
        %s225 = smul.addr %s224, 4
        %s226 = scalar_lea.vmem %s0, %s225
        %s227 = smul.u32 2, %s19
        %s228 = smul.u32 2, %s19
        %v230 = vld [vmem:[%s226] sm:$0xf]
        %v231 = vld [vmem:[%s226 + $0x8] sm:$0xf]
        %v232 = vld [vmem:[%s226 + $0x10] sm:$0xf]
        %v233 = vld [vmem:[%s226 + $0x18] sm:$0xf]
        %v234 = vld [vmem:[%s226 + $0x20] sm:$0xf]
        %v235 = vld [vmem:[%s226 + $0x28] sm:$0xf]
        %v236 = vld [vmem:[%s226 + $0x30] sm:$0xf]
        %v237 = vld [vmem:[%s226 + $0x38] sm:$0xf]
        %v238 = vld [vmem:[%s226 + $0x50] sm:$0xf]
        %v239 = vld [vmem:[%s226 + $0x58] sm:$0xf]
        %v240 = vld [vmem:[%s226 + $0x60] sm:$0xf]
        %v241 = vld [vmem:[%s226 + $0x68] sm:$0xf]
        %v242 = vld [vmem:[%s226 + $0x70] sm:$0xf]
        %v243 = vld [vmem:[%s226 + $0x78] sm:$0xf]
        %v244 = vld [vmem:[%s226 + $0x80] sm:$0xf]
        %v245 = vld [vmem:[%s226 + $0x88] sm:$0xf]
        %v246 = vld [vmem:[%s226 + $0x4] sm:$0x1]
        %v247 = vld [vmem:[%s226 + $0xc] sm:$0x1]
        %v248 = vld [vmem:[%s226 + $0x14] sm:$0x1]
        %v249 = vld [vmem:[%s226 + $0x1c] sm:$0x1]
        %v250 = vld [vmem:[%s226 + $0x24] sm:$0x1]
        %v251 = vld [vmem:[%s226 + $0x2c] sm:$0x1]
        %v252 = vld [vmem:[%s226 + $0x34] sm:$0x1]
        %v253 = vld [vmem:[%s226 + $0x3c] sm:$0x1]
        %v254 = vld [vmem:[%s226 + $0x54] sm:$0x1]
        %v255 = vld [vmem:[%s226 + $0x5c] sm:$0x1]
        %v256 = vld [vmem:[%s226 + $0x64] sm:$0x1]
        %v257 = vld [vmem:[%s226 + $0x6c] sm:$0x1]
        %v258 = vld [vmem:[%s226 + $0x74] sm:$0x1]
        %v259 = vld [vmem:[%s226 + $0x7c] sm:$0x1]
        %v260 = vld [vmem:[%s226 + $0x84] sm:$0x1]
        %v261 = vld [vmem:[%s226 + $0x8c] sm:$0x1]
        %vm262 = vsmask.f32 3328
        %vm263 = vsmask.f32 7440
        %vm264 = vmor %vm262, %vm263
        %v266 = vshrl.u32 %v230, 16
        %v268 = vrot.slane %v266, 4
        %v269 = vshll.u32 %v230, 16
        %v271 = vrot.slane %v269, 5
        %v272 = vor.u32 %v268, %v271
        %v273 = vrot.slane %v272, 4
        %v275 = vshll.u32 %v246, 16
        %v277 = vrot.slane %v275, 5
        %v278 = vsel %vm264, %v273, %v277
        %v280 = vshrl.u32 %v231, 16
        %v282 = vrot.slane %v280, 4
        %v283 = vshll.u32 %v231, 16
        %v285 = vrot.slane %v283, 5
        %v286 = vor.u32 %v282, %v285
        %v287 = vrot.slane %v286, 4
        %v289 = vshll.u32 %v247, 16
        %v291 = vrot.slane %v289, 5
        %v292 = vsel %vm264, %v287, %v291
        %v294 = vshrl.u32 %v232, 16
        %v296 = vrot.slane %v294, 4
        %v297 = vshll.u32 %v232, 16
        %v299 = vrot.slane %v297, 5
        %v300 = vor.u32 %v296, %v299
        %v301 = vrot.slane %v300, 4
        %v303 = vshll.u32 %v248, 16
        %v305 = vrot.slane %v303, 5
        %v306 = vsel %vm264, %v301, %v305
        %v308 = vshrl.u32 %v233, 16
        %v310 = vrot.slane %v308, 4
        %v311 = vshll.u32 %v233, 16
        %v313 = vrot.slane %v311, 5
        %v314 = vor.u32 %v310, %v313
        %v315 = vrot.slane %v314, 4
        %v317 = vshll.u32 %v249, 16
        %v319 = vrot.slane %v317, 5
        %v320 = vsel %vm264, %v315, %v319
        %v322 = vshrl.u32 %v234, 16
        %v324 = vrot.slane %v322, 4
        %v325 = vshll.u32 %v234, 16
        %v327 = vrot.slane %v325, 5
        %v328 = vor.u32 %v324, %v327
        %v329 = vrot.slane %v328, 4
        %v331 = vshll.u32 %v250, 16
        %v333 = vrot.slane %v331, 5
        %v334 = vsel %vm264, %v329, %v333
        %v336 = vshrl.u32 %v235, 16
        %v338 = vrot.slane %v336, 4
        %v339 = vshll.u32 %v235, 16
        %v341 = vrot.slane %v339, 5
        %v342 = vor.u32 %v338, %v341
        %v343 = vrot.slane %v342, 4
        %v345 = vshll.u32 %v251, 16
        %v347 = vrot.slane %v345, 5
        %v348 = vsel %vm264, %v343, %v347
        %v350 = vshrl.u32 %v236, 16
        %v352 = vrot.slane %v350, 4
        %v353 = vshll.u32 %v236, 16
        %v355 = vrot.slane %v353, 5
        %v356 = vor.u32 %v352, %v355
        %v357 = vrot.slane %v356, 4
        %v359 = vshll.u32 %v252, 16
        %v361 = vrot.slane %v359, 5
        %v362 = vsel %vm264, %v357, %v361
        %v364 = vshrl.u32 %v237, 16
        %v366 = vrot.slane %v364, 4
        %v367 = vshll.u32 %v237, 16
        %v369 = vrot.slane %v367, 5
        %v370 = vor.u32 %v366, %v369
        %v371 = vrot.slane %v370, 4
        %v373 = vshll.u32 %v253, 16
        %v375 = vrot.slane %v373, 5
        %v376 = vsel %vm264, %v371, %v375
        %v378 = vshrl.u32 %v238, 16
        %v380 = vrot.slane %v378, 4
        %v381 = vshll.u32 %v238, 16
        %v383 = vrot.slane %v381, 5
        %v384 = vor.u32 %v380, %v383
        %v385 = vrot.slane %v384, 4
        %v387 = vshll.u32 %v254, 16
        %v389 = vrot.slane %v387, 5
        %v390 = vsel %vm264, %v385, %v389
        %v392 = vshrl.u32 %v239, 16
        %v394 = vrot.slane %v392, 4
        %v395 = vshll.u32 %v239, 16
        %v397 = vrot.slane %v395, 5
        %v398 = vor.u32 %v394, %v397
        %v399 = vrot.slane %v398, 4
        %v401 = vshll.u32 %v255, 16
        %v403 = vrot.slane %v401, 5
        %v404 = vsel %vm264, %v399, %v403
        %v406 = vshrl.u32 %v240, 16
        %v408 = vrot.slane %v406, 4
        %v409 = vshll.u32 %v240, 16
        %v411 = vrot.slane %v409, 5
        %v412 = vor.u32 %v408, %v411
        %v413 = vrot.slane %v412, 4
        %v415 = vshll.u32 %v256, 16
        %v417 = vrot.slane %v415, 5
        %v418 = vsel %vm264, %v413, %v417
        %v420 = vshrl.u32 %v241, 16
        %v422 = vrot.slane %v420, 4
        %v423 = vshll.u32 %v241, 16
        %v425 = vrot.slane %v423, 5
        %v426 = vor.u32 %v422, %v425
        %v427 = vrot.slane %v426, 4
        %v429 = vshll.u32 %v257, 16
        %v431 = vrot.slane %v429, 5
        %v432 = vsel %vm264, %v427, %v431
        %v434 = vshrl.u32 %v242, 16
        %v436 = vrot.slane %v434, 4
        %v437 = vshll.u32 %v242, 16
        %v439 = vrot.slane %v437, 5
        %v440 = vor.u32 %v436, %v439
        %v441 = vrot.slane %v440, 4
        %v443 = vshll.u32 %v258, 16
        %v445 = vrot.slane %v443, 5
        %v446 = vsel %vm264, %v441, %v445
        %v448 = vshrl.u32 %v243, 16
        %v450 = vrot.slane %v448, 4
        %v451 = vshll.u32 %v243, 16
        %v453 = vrot.slane %v451, 5
        %v454 = vor.u32 %v450, %v453
        %v455 = vrot.slane %v454, 4
        %v457 = vshll.u32 %v259, 16
        %v459 = vrot.slane %v457, 5
        %v460 = vsel %vm264, %v455, %v459
        %v462 = vshrl.u32 %v244, 16
        %v464 = vrot.slane %v462, 4
        %v465 = vshll.u32 %v244, 16
        %v467 = vrot.slane %v465, 5
        %v468 = vor.u32 %v464, %v467
        %v469 = vrot.slane %v468, 4
        %v471 = vshll.u32 %v260, 16
        %v473 = vrot.slane %v471, 5
        %v474 = vsel %vm264, %v469, %v473
        %v476 = vshrl.u32 %v245, 16
        %v478 = vrot.slane %v476, 4
        %v479 = vshll.u32 %v245, 16
        %v481 = vrot.slane %v479, 5
        %v482 = vor.u32 %v478, %v481
        %v483 = vrot.slane %v482, 4
        %v485 = vshll.u32 %v261, 16
        %v487 = vrot.slane %v485, 5
        %v488 = vsel %vm264, %v483, %v487
        %v489 = vld [vmem:[%s226] sm:$0xe]
        %v490 = vld [vmem:[%s226 + $0x8] sm:$0xe]
        %v491 = vld [vmem:[%s226 + $0x10] sm:$0xe]
        %v492 = vld [vmem:[%s226 + $0x18] sm:$0xe]
        %v493 = vld [vmem:[%s226 + $0x20] sm:$0xe]
        %v494 = vld [vmem:[%s226 + $0x28] sm:$0xe]
        %v495 = vld [vmem:[%s226 + $0x30] sm:$0xe]
        %v496 = vld [vmem:[%s226 + $0x38] sm:$0xe]
        %v497 = vld [vmem:[%s226 + $0x50] sm:$0xe]
        %v498 = vld [vmem:[%s226 + $0x58] sm:$0xe]
        %v499 = vld [vmem:[%s226 + $0x60] sm:$0xe]
        %v500 = vld [vmem:[%s226 + $0x68] sm:$0xe]
        %v501 = vld [vmem:[%s226 + $0x70] sm:$0xe]
        %v502 = vld [vmem:[%s226 + $0x78] sm:$0xe]
        %v503 = vld [vmem:[%s226 + $0x80] sm:$0xe]
        %v504 = vld [vmem:[%s226 + $0x88] sm:$0xe]
        %vm537 = vcmask 1042432
        %vm538 = vcmask 1046532
        %vm539 = vmor %vm537, %vm538
        %v540 = vrot.slane %v489, 5
        %v541 = vrot.slane %v540, 4
        %v542 = vrot.slane %v246, 5
        %v543 = vsel %vm539, %v541, %v542
        %v544 = vrot.slane %v490, 5
        %v545 = vrot.slane %v544, 4
        %v546 = vrot.slane %v247, 5
        %v547 = vsel %vm539, %v545, %v546
        %v548 = vrot.slane %v491, 5
        %v549 = vrot.slane %v548, 4
        %v550 = vrot.slane %v248, 5
        %v551 = vsel %vm539, %v549, %v550
        %v552 = vrot.slane %v492, 5
        %v553 = vrot.slane %v552, 4
        %v554 = vrot.slane %v249, 5
        %v555 = vsel %vm539, %v553, %v554
        %v556 = vrot.slane %v493, 5
        %v557 = vrot.slane %v556, 4
        %v558 = vrot.slane %v250, 5
        %v559 = vsel %vm539, %v557, %v558
        %v560 = vrot.slane %v494, 5
        %v561 = vrot.slane %v560, 4
        %v562 = vrot.slane %v251, 5
        %v563 = vsel %vm539, %v561, %v562
        %v564 = vrot.slane %v495, 5
        %v565 = vrot.slane %v564, 4
        %v566 = vrot.slane %v252, 5
        %v567 = vsel %vm539, %v565, %v566
        %v568 = vrot.slane %v496, 5
        %v569 = vrot.slane %v568, 4
        %v570 = vrot.slane %v253, 5
        %v571 = vsel %vm539, %v569, %v570
        %v572 = vrot.slane %v497, 5
        %v573 = vrot.slane %v572, 4
        %v574 = vrot.slane %v254, 5
        %v575 = vsel %vm539, %v573, %v574
        %v576 = vrot.slane %v498, 5
        %v577 = vrot.slane %v576, 4
        %v578 = vrot.slane %v255, 5
        %v579 = vsel %vm539, %v577, %v578
        %v580 = vrot.slane %v499, 5
        %v581 = vrot.slane %v580, 4
        %v582 = vrot.slane %v256, 5
        %v583 = vsel %vm539, %v581, %v582
        %v584 = vrot.slane %v500, 5
        %v585 = vrot.slane %v584, 4
        %v586 = vrot.slane %v257, 5
        %v587 = vsel %vm539, %v585, %v586
        %v588 = vrot.slane %v501, 5
        %v589 = vrot.slane %v588, 4
        %v590 = vrot.slane %v258, 5
        %v591 = vsel %vm539, %v589, %v590
        %v592 = vrot.slane %v502, 5
        %v593 = vrot.slane %v592, 4
        %v594 = vrot.slane %v259, 5
        %v595 = vsel %vm539, %v593, %v594
        %v596 = vrot.slane %v503, 5
        %v597 = vrot.slane %v596, 4
        %v598 = vrot.slane %v260, 5
        %v599 = vsel %vm539, %v597, %v598
        %v600 = vrot.slane %v504, 5
        %v601 = vrot.slane %v600, 4
        %v602 = vrot.slane %v261, 5
        %v603 = vsel %vm539, %v601, %v602
        %s604 = scalar_lea.vmem %s226, 8
        %v605 = vld [vmem:[%s604] sm:$0xf]
        %v606 = vld [vmem:[%s604 + $0x8] sm:$0xf]
        %v607 = vld [vmem:[%s604 + $0x10] sm:$0xf]
        %v608 = vld [vmem:[%s604 + $0x18] sm:$0xf]
        %v609 = vld [vmem:[%s604 + $0x20] sm:$0xf]
        %v610 = vld [vmem:[%s604 + $0x28] sm:$0xf]
        %v611 = vld [vmem:[%s604 + $0x30] sm:$0xf]
        %v612 = vld [vmem:[%s604 + $0x38] sm:$0xf]
        %v613 = vld [vmem:[%s604 + $0x50] sm:$0xf]
        %v614 = vld [vmem:[%s604 + $0x58] sm:$0xf]
        %v615 = vld [vmem:[%s604 + $0x60] sm:$0xf]
        %v616 = vld [vmem:[%s604 + $0x68] sm:$0xf]
        %v617 = vld [vmem:[%s604 + $0x70] sm:$0xf]
        %v618 = vld [vmem:[%s604 + $0x78] sm:$0xf]
        %v619 = vld [vmem:[%s604 + $0x80] sm:$0xf]
        %v620 = vld [vmem:[%s604 + $0x88] sm:$0xf]
        %v621 = vld [vmem:[%s604 + $0x4] sm:$0x1]
        %v622 = vld [vmem:[%s604 + $0xc] sm:$0x1]
        %v623 = vld [vmem:[%s604 + $0x14] sm:$0x1]
        %v624 = vld [vmem:[%s604 + $0x1c] sm:$0x1]
        %v625 = vld [vmem:[%s604 + $0x24] sm:$0x1]
        %v626 = vld [vmem:[%s604 + $0x2c] sm:$0x1]
        %v627 = vld [vmem:[%s604 + $0x34] sm:$0x1]
        %v628 = vld [vmem:[%s604 + $0x3c] sm:$0x1]
        %v629 = vld [vmem:[%s604 + $0x54] sm:$0x1]
        %v630 = vld [vmem:[%s604 + $0x5c] sm:$0x1]
        %v631 = vld [vmem:[%s604 + $0x64] sm:$0x1]
        %v632 = vld [vmem:[%s604 + $0x6c] sm:$0x1]
        %v633 = vld [vmem:[%s604 + $0x74] sm:$0x1]
        %v634 = vld [vmem:[%s604 + $0x7c] sm:$0x1]
        %v635 = vld [vmem:[%s604 + $0x84] sm:$0x1]
        %v636 = vld [vmem:[%s604 + $0x8c] sm:$0x1]
        %v638 = vshrl.u32 %v605, 16
        %v640 = vrot.slane %v638, 4
        %v641 = vshll.u32 %v605, 16
        %v643 = vrot.slane %v641, 5
        %v644 = vor.u32 %v640, %v643
        %v645 = vrot.slane %v644, 4
        %v647 = vshll.u32 %v621, 16
        %v649 = vrot.slane %v647, 5
        %v650 = vsel %vm264, %v645, %v649
        %v652 = vshrl.u32 %v606, 16
        %v654 = vrot.slane %v652, 4
        %v655 = vshll.u32 %v606, 16
        %v657 = vrot.slane %v655, 5
        %v658 = vor.u32 %v654, %v657
        %v659 = vrot.slane %v658, 4
        %v661 = vshll.u32 %v622, 16
        %v663 = vrot.slane %v661, 5
        %v664 = vsel %vm264, %v659, %v663
        %v666 = vshrl.u32 %v607, 16
        %v668 = vrot.slane %v666, 4
        %v669 = vshll.u32 %v607, 16
        %v671 = vrot.slane %v669, 5
        %v672 = vor.u32 %v668, %v671
        %v673 = vrot.slane %v672, 4
        %v675 = vshll.u32 %v623, 16
        %v677 = vrot.slane %v675, 5
        %v678 = vsel %vm264, %v673, %v677
        %v680 = vshrl.u32 %v608, 16
        %v682 = vrot.slane %v680, 4
        %v683 = vshll.u32 %v608, 16
        %v685 = vrot.slane %v683, 5
        %v686 = vor.u32 %v682, %v685
        %v687 = vrot.slane %v686, 4
        %v689 = vshll.u32 %v624, 16
        %v691 = vrot.slane %v689, 5
        %v692 = vsel %vm264, %v687, %v691
        %v694 = vshrl.u32 %v609, 16
        %v696 = vrot.slane %v694, 4
        %v697 = vshll.u32 %v609, 16
        %v699 = vrot.slane %v697, 5
        %v700 = vor.u32 %v696, %v699
        %v701 = vrot.slane %v700, 4
        %v703 = vshll.u32 %v625, 16
        %v705 = vrot.slane %v703, 5
        %v706 = vsel %vm264, %v701, %v705
        %v708 = vshrl.u32 %v610, 16
        %v710 = vrot.slane %v708, 4
        %v711 = vshll.u32 %v610, 16
        %v713 = vrot.slane %v711, 5
        %v714 = vor.u32 %v710, %v713
        %v715 = vrot.slane %v714, 4
        %v717 = vshll.u32 %v626, 16
        %v719 = vrot.slane %v717, 5
        %v720 = vsel %vm264, %v715, %v719
        %v722 = vshrl.u32 %v611, 16
        %v724 = vrot.slane %v722, 4
        %v725 = vshll.u32 %v611, 16
        %v727 = vrot.slane %v725, 5
        %v728 = vor.u32 %v724, %v727
        %v729 = vrot.slane %v728, 4
        %v731 = vshll.u32 %v627, 16
        %v733 = vrot.slane %v731, 5
        %v734 = vsel %vm264, %v729, %v733
        %v736 = vshrl.u32 %v612, 16
        %v738 = vrot.slane %v736, 4
        %v739 = vshll.u32 %v612, 16
        %v741 = vrot.slane %v739, 5
        %v742 = vor.u32 %v738, %v741
        %v743 = vrot.slane %v742, 4
        %v745 = vshll.u32 %v628, 16
        %v747 = vrot.slane %v745, 5
        %v748 = vsel %vm264, %v743, %v747
        %v750 = vshrl.u32 %v613, 16
        %v752 = vrot.slane %v750, 4
        %v753 = vshll.u32 %v613, 16
        %v755 = vrot.slane %v753, 5
        %v756 = vor.u32 %v752, %v755
        %v757 = vrot.slane %v756, 4
        %v759 = vshll.u32 %v629, 16
        %v761 = vrot.slane %v759, 5
        %v762 = vsel %vm264, %v757, %v761
        %v764 = vshrl.u32 %v614, 16
        %v766 = vrot.slane %v764, 4
        %v767 = vshll.u32 %v614, 16
        %v769 = vrot.slane %v767, 5
        %v770 = vor.u32 %v766, %v769
        %v771 = vrot.slane %v770, 4
        %v773 = vshll.u32 %v630, 16
        %v775 = vrot.slane %v773, 5
        %v776 = vsel %vm264, %v771, %v775
        %v778 = vshrl.u32 %v615, 16
        %v780 = vrot.slane %v778, 4
        %v781 = vshll.u32 %v615, 16
        %v783 = vrot.slane %v781, 5
        %v784 = vor.u32 %v780, %v783
        %v785 = vrot.slane %v784, 4
        %v787 = vshll.u32 %v631, 16
        %v789 = vrot.slane %v787, 5
        %v790 = vsel %vm264, %v785, %v789
        %v792 = vshrl.u32 %v616, 16
        %v794 = vrot.slane %v792, 4
        %v795 = vshll.u32 %v616, 16
        %v797 = vrot.slane %v795, 5
        %v798 = vor.u32 %v794, %v797
        %v799 = vrot.slane %v798, 4
        %v801 = vshll.u32 %v632, 16
        %v803 = vrot.slane %v801, 5
        %v804 = vsel %vm264, %v799, %v803
        %v806 = vshrl.u32 %v617, 16
        %v808 = vrot.slane %v806, 4
        %v809 = vshll.u32 %v617, 16
        %v811 = vrot.slane %v809, 5
        %v812 = vor.u32 %v808, %v811
        %v813 = vrot.slane %v812, 4
        %v815 = vshll.u32 %v633, 16
        %v817 = vrot.slane %v815, 5
        %v818 = vsel %vm264, %v813, %v817
        %v820 = vshrl.u32 %v618, 16
        %v822 = vrot.slane %v820, 4
        %v823 = vshll.u32 %v618, 16
        %v825 = vrot.slane %v823, 5
        %v826 = vor.u32 %v822, %v825
        %v827 = vrot.slane %v826, 4
        %v829 = vshll.u32 %v634, 16
        %v831 = vrot.slane %v829, 5
        %v832 = vsel %vm264, %v827, %v831
        %v834 = vshrl.u32 %v619, 16
        %v836 = vrot.slane %v834, 4
        %v837 = vshll.u32 %v619, 16
        %v839 = vrot.slane %v837, 5
        %v840 = vor.u32 %v836, %v839
        %v841 = vrot.slane %v840, 4
        %v843 = vshll.u32 %v635, 16
        %v845 = vrot.slane %v843, 5
        %v846 = vsel %vm264, %v841, %v845
        %v848 = vshrl.u32 %v620, 16
        %v850 = vrot.slane %v848, 4
        %v851 = vshll.u32 %v620, 16
        %v853 = vrot.slane %v851, 5
        %v854 = vor.u32 %v850, %v853
        %v855 = vrot.slane %v854, 4
        %v857 = vshll.u32 %v636, 16
        %v859 = vrot.slane %v857, 5
        %v860 = vsel %vm264, %v855, %v859
        %v861 = vld [vmem:[%s604] sm:$0xe]
        %v862 = vld [vmem:[%s604 + $0x8] sm:$0xe]
        %v863 = vld [vmem:[%s604 + $0x10] sm:$0xe]
        %v864 = vld [vmem:[%s604 + $0x18] sm:$0xe]
        %v865 = vld [vmem:[%s604 + $0x20] sm:$0xe]
        %v866 = vld [vmem:[%s604 + $0x28] sm:$0xe]
        %v867 = vld [vmem:[%s604 + $0x30] sm:$0xe]
        %v868 = vld [vmem:[%s604 + $0x38] sm:$0xe]
        %v869 = vld [vmem:[%s604 + $0x50] sm:$0xe]
        %v870 = vld [vmem:[%s604 + $0x58] sm:$0xe]
        %v871 = vld [vmem:[%s604 + $0x60] sm:$0xe]
        %v872 = vld [vmem:[%s604 + $0x68] sm:$0xe]
        %v873 = vld [vmem:[%s604 + $0x70] sm:$0xe]
        %v874 = vld [vmem:[%s604 + $0x78] sm:$0xe]
        %v875 = vld [vmem:[%s604 + $0x80] sm:$0xe]
        %v876 = vld [vmem:[%s604 + $0x88] sm:$0xe]
        %v909 = vrot.slane %v861, 5
        %v910 = vrot.slane %v909, 4
        %v911 = vrot.slane %v621, 5
        %v912 = vsel %vm539, %v910, %v911
        %v913 = vrot.slane %v862, 5
        %v914 = vrot.slane %v913, 4
        %v915 = vrot.slane %v622, 5
        %v916 = vsel %vm539, %v914, %v915
        %v917 = vrot.slane %v863, 5
        %v918 = vrot.slane %v917, 4
        %v919 = vrot.slane %v623, 5
        %v920 = vsel %vm539, %v918, %v919
        %v921 = vrot.slane %v864, 5
        %v922 = vrot.slane %v921, 4
        %v923 = vrot.slane %v624, 5
        %v924 = vsel %vm539, %v922, %v923
        %v925 = vrot.slane %v865, 5
        %v926 = vrot.slane %v925, 4
        %v927 = vrot.slane %v625, 5
        %v928 = vsel %vm539, %v926, %v927
        %v929 = vrot.slane %v866, 5
        %v930 = vrot.slane %v929, 4
        %v931 = vrot.slane %v626, 5
        %v932 = vsel %vm539, %v930, %v931
        %v933 = vrot.slane %v867, 5
        %v934 = vrot.slane %v933, 4
        %v935 = vrot.slane %v627, 5
        %v936 = vsel %vm539, %v934, %v935
        %v937 = vrot.slane %v868, 5
        %v938 = vrot.slane %v937, 4
        %v939 = vrot.slane %v628, 5
        %v940 = vsel %vm539, %v938, %v939
        %v941 = vrot.slane %v869, 5
        %v942 = vrot.slane %v941, 4
        %v943 = vrot.slane %v629, 5
        %v944 = vsel %vm539, %v942, %v943
        %v945 = vrot.slane %v870, 5
        %v946 = vrot.slane %v945, 4
        %v947 = vrot.slane %v630, 5
        %v948 = vsel %vm539, %v946, %v947
        %v949 = vrot.slane %v871, 5
        %v950 = vrot.slane %v949, 4
        %v951 = vrot.slane %v631, 5
        %v952 = vsel %vm539, %v950, %v951
        %v953 = vrot.slane %v872, 5
        %v954 = vrot.slane %v953, 4
        %v955 = vrot.slane %v632, 5
        %v956 = vsel %vm539, %v954, %v955
        %v957 = vrot.slane %v873, 5
        %v958 = vrot.slane %v957, 4
        %v959 = vrot.slane %v633, 5
        %v960 = vsel %vm539, %v958, %v959
        %v961 = vrot.slane %v874, 5
        %v962 = vrot.slane %v961, 4
        %v963 = vrot.slane %v634, 5
        %v964 = vsel %vm539, %v962, %v963
        %v965 = vrot.slane %v875, 5
        %v966 = vrot.slane %v965, 4
        %v967 = vrot.slane %v635, 5
        %v968 = vsel %vm539, %v966, %v967
        %v969 = vrot.slane %v876, 5
        %v970 = vrot.slane %v969, 4
        %v971 = vrot.slane %v636, 5
        %v972 = vsel %vm539, %v970, %v971
        %s973 = scalar_lea.vmem %s226, 16
        %v974 = vld [vmem:[%s973] sm:$0xf]
        %v975 = vld [vmem:[%s973 + $0x8] sm:$0xf]
        %v976 = vld [vmem:[%s973 + $0x10] sm:$0xf]
        %v977 = vld [vmem:[%s973 + $0x18] sm:$0xf]
        %v978 = vld [vmem:[%s973 + $0x20] sm:$0xf]
        %v979 = vld [vmem:[%s973 + $0x28] sm:$0xf]
        %v980 = vld [vmem:[%s973 + $0x30] sm:$0xf]
        %v981 = vld [vmem:[%s973 + $0x38] sm:$0xf]
        %v982 = vld [vmem:[%s973 + $0x50] sm:$0xf]
        %v983 = vld [vmem:[%s973 + $0x58] sm:$0xf]
        %v984 = vld [vmem:[%s973 + $0x60] sm:$0xf]
        %v985 = vld [vmem:[%s973 + $0x68] sm:$0xf]
        %v986 = vld [vmem:[%s973 + $0x70] sm:$0xf]
        %v987 = vld [vmem:[%s973 + $0x78] sm:$0xf]
        %v988 = vld [vmem:[%s973 + $0x80] sm:$0xf]
        %v989 = vld [vmem:[%s973 + $0x88] sm:$0xf]
        %v990 = vld [vmem:[%s973 + $0x4] sm:$0x1]
        %v991 = vld [vmem:[%s973 + $0xc] sm:$0x1]
        %v992 = vld [vmem:[%s973 + $0x14] sm:$0x1]
        %v993 = vld [vmem:[%s973 + $0x1c] sm:$0x1]
        %v994 = vld [vmem:[%s973 + $0x24] sm:$0x1]
        %v995 = vld [vmem:[%s973 + $0x2c] sm:$0x1]
        %v996 = vld [vmem:[%s973 + $0x34] sm:$0x1]
        %v997 = vld [vmem:[%s973 + $0x3c] sm:$0x1]
        %v998 = vld [vmem:[%s973 + $0x54] sm:$0x1]
        %v999 = vld [vmem:[%s973 + $0x5c] sm:$0x1]
        %v1000 = vld [vmem:[%s973 + $0x64] sm:$0x1]
        %v1001 = vld [vmem:[%s973 + $0x6c] sm:$0x1]
        %v1002 = vld [vmem:[%s973 + $0x74] sm:$0x1]
        %v1003 = vld [vmem:[%s973 + $0x7c] sm:$0x1]
        %v1004 = vld [vmem:[%s973 + $0x84] sm:$0x1]
        %v1005 = vld [vmem:[%s973 + $0x8c] sm:$0x1]
        %v1007 = vshrl.u32 %v974, 16
        %v1009 = vrot.slane %v1007, 4
        %v1010 = vshll.u32 %v974, 16
        %v1012 = vrot.slane %v1010, 5
        %v1013 = vor.u32 %v1009, %v1012
        %v1014 = vrot.slane %v1013, 4
        %v1016 = vshll.u32 %v990, 16
        %v1018 = vrot.slane %v1016, 5
        %v1019 = vsel %vm264, %v1014, %v1018
        %v1021 = vshrl.u32 %v975, 16
        %v1023 = vrot.slane %v1021, 4
        %v1024 = vshll.u32 %v975, 16
        %v1026 = vrot.slane %v1024, 5
        %v1027 = vor.u32 %v1023, %v1026
        %v1028 = vrot.slane %v1027, 4
        %v1030 = vshll.u32 %v991, 16
        %v1032 = vrot.slane %v1030, 5
        %v1033 = vsel %vm264, %v1028, %v1032
        %v1035 = vshrl.u32 %v976, 16
        %v1037 = vrot.slane %v1035, 4
        %v1038 = vshll.u32 %v976, 16
        %v1040 = vrot.slane %v1038, 5
        %v1041 = vor.u32 %v1037, %v1040
        %v1042 = vrot.slane %v1041, 4
        %v1044 = vshll.u32 %v992, 16
        %v1046 = vrot.slane %v1044, 5
        %v1047 = vsel %vm264, %v1042, %v1046
        %v1049 = vshrl.u32 %v977, 16
        %v1051 = vrot.slane %v1049, 4
        %v1052 = vshll.u32 %v977, 16
        %v1054 = vrot.slane %v1052, 5
        %v1055 = vor.u32 %v1051, %v1054
        %v1056 = vrot.slane %v1055, 4
        %v1058 = vshll.u32 %v993, 16
        %v1060 = vrot.slane %v1058, 5
        %v1061 = vsel %vm264, %v1056, %v1060
        %v1063 = vshrl.u32 %v978, 16
        %v1065 = vrot.slane %v1063, 4
        %v1066 = vshll.u32 %v978, 16
        %v1068 = vrot.slane %v1066, 5
        %v1069 = vor.u32 %v1065, %v1068
        %v1070 = vrot.slane %v1069, 4
        %v1072 = vshll.u32 %v994, 16
        %v1074 = vrot.slane %v1072, 5
        %v1075 = vsel %vm264, %v1070, %v1074
        %v1077 = vshrl.u32 %v979, 16
        %v1079 = vrot.slane %v1077, 4
        %v1080 = vshll.u32 %v979, 16
        %v1082 = vrot.slane %v1080, 5
        %v1083 = vor.u32 %v1079, %v1082
        %v1084 = vrot.slane %v1083, 4
        %v1086 = vshll.u32 %v995, 16
        %v1088 = vrot.slane %v1086, 5
        %v1089 = vsel %vm264, %v1084, %v1088
        %v1091 = vshrl.u32 %v980, 16
        %v1093 = vrot.slane %v1091, 4
        %v1094 = vshll.u32 %v980, 16
        %v1096 = vrot.slane %v1094, 5
        %v1097 = vor.u32 %v1093, %v1096
        %v1098 = vrot.slane %v1097, 4
        %v1100 = vshll.u32 %v996, 16
        %v1102 = vrot.slane %v1100, 5
        %v1103 = vsel %vm264, %v1098, %v1102
        %v1105 = vshrl.u32 %v981, 16
        %v1107 = vrot.slane %v1105, 4
        %v1108 = vshll.u32 %v981, 16
        %v1110 = vrot.slane %v1108, 5
        %v1111 = vor.u32 %v1107, %v1110
        %v1112 = vrot.slane %v1111, 4
        %v1114 = vshll.u32 %v997, 16
        %v1116 = vrot.slane %v1114, 5
        %v1117 = vsel %vm264, %v1112, %v1116
        %v1119 = vshrl.u32 %v982, 16
        %v1121 = vrot.slane %v1119, 4
        %v1122 = vshll.u32 %v982, 16
        %v1124 = vrot.slane %v1122, 5
        %v1125 = vor.u32 %v1121, %v1124
        %v1126 = vrot.slane %v1125, 4
        %v1128 = vshll.u32 %v998, 16
        %v1130 = vrot.slane %v1128, 5
        %v1131 = vsel %vm264, %v1126, %v1130
        %v1133 = vshrl.u32 %v983, 16
        %v1135 = vrot.slane %v1133, 4
        %v1136 = vshll.u32 %v983, 16
        %v1138 = vrot.slane %v1136, 5
        %v1139 = vor.u32 %v1135, %v1138
        %v1140 = vrot.slane %v1139, 4
        %v1142 = vshll.u32 %v999, 16
        %v1144 = vrot.slane %v1142, 5
        %v1145 = vsel %vm264, %v1140, %v1144
        %v1147 = vshrl.u32 %v984, 16
        %v1149 = vrot.slane %v1147, 4
        %v1150 = vshll.u32 %v984, 16
        %v1152 = vrot.slane %v1150, 5
        %v1153 = vor.u32 %v1149, %v1152
        %v1154 = vrot.slane %v1153, 4
        %v1156 = vshll.u32 %v1000, 16
        %v1158 = vrot.slane %v1156, 5
        %v1159 = vsel %vm264, %v1154, %v1158
        %v1161 = vshrl.u32 %v985, 16
        %v1163 = vrot.slane %v1161, 4
        %v1164 = vshll.u32 %v985, 16
        %v1166 = vrot.slane %v1164, 5
        %v1167 = vor.u32 %v1163, %v1166
        %v1168 = vrot.slane %v1167, 4
        %v1170 = vshll.u32 %v1001, 16
        %v1172 = vrot.slane %v1170, 5
        %v1173 = vsel %vm264, %v1168, %v1172
        %v1175 = vshrl.u32 %v986, 16
        %v1177 = vrot.slane %v1175, 4
        %v1178 = vshll.u32 %v986, 16
        %v1180 = vrot.slane %v1178, 5
        %v1181 = vor.u32 %v1177, %v1180
        %v1182 = vrot.slane %v1181, 4
        %v1184 = vshll.u32 %v1002, 16
        %v1186 = vrot.slane %v1184, 5
        %v1187 = vsel %vm264, %v1182, %v1186
        %v1189 = vshrl.u32 %v987, 16
        %v1191 = vrot.slane %v1189, 4
        %v1192 = vshll.u32 %v987, 16
        %v1194 = vrot.slane %v1192, 5
        %v1195 = vor.u32 %v1191, %v1194
        %v1196 = vrot.slane %v1195, 4
        %v1198 = vshll.u32 %v1003, 16
        %v1200 = vrot.slane %v1198, 5
        %v1201 = vsel %vm264, %v1196, %v1200
        %v1203 = vshrl.u32 %v988, 16
        %v1205 = vrot.slane %v1203, 4
        %v1206 = vshll.u32 %v988, 16
        %v1208 = vrot.slane %v1206, 5
        %v1209 = vor.u32 %v1205, %v1208
        %v1210 = vrot.slane %v1209, 4
        %v1212 = vshll.u32 %v1004, 16
        %v1214 = vrot.slane %v1212, 5
        %v1215 = vsel %vm264, %v1210, %v1214
        %v1217 = vshrl.u32 %v989, 16
        %v1219 = vrot.slane %v1217, 4
        %v1220 = vshll.u32 %v989, 16
        %v1222 = vrot.slane %v1220, 5
        %v1223 = vor.u32 %v1219, %v1222
        %v1224 = vrot.slane %v1223, 4
        %v1226 = vshll.u32 %v1005, 16
        %v1228 = vrot.slane %v1226, 5
        %v1229 = vsel %vm264, %v1224, %v1228
        %v1230 = vld [vmem:[%s973] sm:$0xe]
        %v1231 = vld [vmem:[%s973 + $0x8] sm:$0xe]
        %v1232 = vld [vmem:[%s973 + $0x10] sm:$0xe]
        %v1233 = vld [vmem:[%s973 + $0x18] sm:$0xe]
        %v1234 = vld [vmem:[%s973 + $0x20] sm:$0xe]
        %v1235 = vld [vmem:[%s973 + $0x28] sm:$0xe]
        %v1236 = vld [vmem:[%s973 + $0x30] sm:$0xe]
        %v1237 = vld [vmem:[%s973 + $0x38] sm:$0xe]
        %v1238 = vld [vmem:[%s973 + $0x50] sm:$0xe]
        %v1239 = vld [vmem:[%s973 + $0x58] sm:$0xe]
        %v1240 = vld [vmem:[%s973 + $0x60] sm:$0xe]
        %v1241 = vld [vmem:[%s973 + $0x68] sm:$0xe]
        %v1242 = vld [vmem:[%s973 + $0x70] sm:$0xe]
        %v1243 = vld [vmem:[%s973 + $0x78] sm:$0xe]
        %v1244 = vld [vmem:[%s973 + $0x80] sm:$0xe]
        %v1245 = vld [vmem:[%s973 + $0x88] sm:$0xe]
        %v1278 = vrot.slane %v1230, 5
        %v1279 = vrot.slane %v1278, 4
        %v1280 = vrot.slane %v990, 5
        %v1281 = vsel %vm539, %v1279, %v1280
        %v1282 = vrot.slane %v1231, 5
        %v1283 = vrot.slane %v1282, 4
        %v1284 = vrot.slane %v991, 5
        %v1285 = vsel %vm539, %v1283, %v1284
        %v1286 = vrot.slane %v1232, 5
        %v1287 = vrot.slane %v1286, 4
        %v1288 = vrot.slane %v992, 5
        %v1289 = vsel %vm539, %v1287, %v1288
        %v1290 = vrot.slane %v1233, 5
        %v1291 = vrot.slane %v1290, 4
        %v1292 = vrot.slane %v993, 5
        %v1293 = vsel %vm539, %v1291, %v1292
        %v1294 = vrot.slane %v1234, 5
        %v1295 = vrot.slane %v1294, 4
        %v1296 = vrot.slane %v994, 5
        %v1297 = vsel %vm539, %v1295, %v1296
        %v1298 = vrot.slane %v1235, 5
        %v1299 = vrot.slane %v1298, 4
        %v1300 = vrot.slane %v995, 5
        %v1301 = vsel %vm539, %v1299, %v1300
        %v1302 = vrot.slane %v1236, 5
        %v1303 = vrot.slane %v1302, 4
        %v1304 = vrot.slane %v996, 5
        %v1305 = vsel %vm539, %v1303, %v1304
        %v1306 = vrot.slane %v1237, 5
        %v1307 = vrot.slane %v1306, 4
        %v1308 = vrot.slane %v997, 5
        %v1309 = vsel %vm539, %v1307, %v1308
        %v1310 = vrot.slane %v1238, 5
        %v1311 = vrot.slane %v1310, 4
        %v1312 = vrot.slane %v998, 5
        %v1313 = vsel %vm539, %v1311, %v1312
        %v1314 = vrot.slane %v1239, 5
        %v1315 = vrot.slane %v1314, 4
        %v1316 = vrot.slane %v999, 5
        %v1317 = vsel %vm539, %v1315, %v1316
        %v1318 = vrot.slane %v1240, 5
        %v1319 = vrot.slane %v1318, 4
        %v1320 = vrot.slane %v1000, 5
        %v1321 = vsel %vm539, %v1319, %v1320
        %v1322 = vrot.slane %v1241, 5
        %v1323 = vrot.slane %v1322, 4
        %v1324 = vrot.slane %v1001, 5
        %v1325 = vsel %vm539, %v1323, %v1324
        %v1326 = vrot.slane %v1242, 5
        %v1327 = vrot.slane %v1326, 4
        %v1328 = vrot.slane %v1002, 5
        %v1329 = vsel %vm539, %v1327, %v1328
        %v1330 = vrot.slane %v1243, 5
        %v1331 = vrot.slane %v1330, 4
        %v1332 = vrot.slane %v1003, 5
        %v1333 = vsel %vm539, %v1331, %v1332
        %v1334 = vrot.slane %v1244, 5
        %v1335 = vrot.slane %v1334, 4
        %v1336 = vrot.slane %v1004, 5
        %v1337 = vsel %vm539, %v1335, %v1336
        %v1338 = vrot.slane %v1245, 5
        %v1339 = vrot.slane %v1338, 4
        %v1340 = vrot.slane %v1005, 5
        %v1341 = vsel %vm539, %v1339, %v1340
        %v1358 = vunpack.c.l.b16 %v230
        %v1359 = vunpack.c.l.b16 %v231
        %v1360 = vunpack.c.l.b16 %v232
        %v1361 = vunpack.c.l.b16 %v233
        %v1362 = vunpack.c.l.b16 %v234
        %v1363 = vunpack.c.l.b16 %v235
        %v1364 = vunpack.c.l.b16 %v236
        %v1365 = vunpack.c.l.b16 %v237
        %v1366 = vunpack.c.l.b16 %v238
        %v1367 = vunpack.c.l.b16 %v239
        %v1368 = vunpack.c.l.b16 %v240
        %v1369 = vunpack.c.l.b16 %v241
        %v1370 = vunpack.c.l.b16 %v242
        %v1371 = vunpack.c.l.b16 %v243
        %v1372 = vunpack.c.l.b16 %v244
        %v1373 = vunpack.c.l.b16 %v245
        %v1374 = vpack.c.b16 %v1359, %v1358
        %v1375 = vpack.c.b16 %v1361, %v1360
        %v1376 = vpack.c.b16 %v1363, %v1362
        %v1377 = vpack.c.b16 %v1365, %v1364
        %v1378 = vpack.c.b16 %v1367, %v1366
        %v1379 = vpack.c.b16 %v1369, %v1368
        %v1380 = vpack.c.b16 %v1371, %v1370
        %v1381 = vpack.c.b16 %v1373, %v1372
        %v1382 = vunpack.c.l.b16 %v278
        %v1383 = vunpack.c.l.b16 %v292
        %v1384 = vunpack.c.l.b16 %v306
        %v1385 = vunpack.c.l.b16 %v320
        %v1386 = vunpack.c.l.b16 %v334
        %v1387 = vunpack.c.l.b16 %v348
        %v1388 = vunpack.c.l.b16 %v362
        %v1389 = vunpack.c.l.b16 %v376
        %v1390 = vunpack.c.l.b16 %v390
        %v1391 = vunpack.c.l.b16 %v404
        %v1392 = vunpack.c.l.b16 %v418
        %v1393 = vunpack.c.l.b16 %v432
        %v1394 = vunpack.c.l.b16 %v446
        %v1395 = vunpack.c.l.b16 %v460
        %v1396 = vunpack.c.l.b16 %v474
        %v1397 = vunpack.c.l.b16 %v488
        %v1398 = vpack.c.b16 %v1383, %v1382
        %v1399 = vpack.c.b16 %v1385, %v1384
        %v1400 = vpack.c.b16 %v1387, %v1386
        %v1401 = vpack.c.b16 %v1389, %v1388
        %v1402 = vpack.c.b16 %v1391, %v1390
        %v1403 = vpack.c.b16 %v1393, %v1392
        %v1404 = vpack.c.b16 %v1395, %v1394
        %v1405 = vpack.c.b16 %v1397, %v1396
        %1406 = vrot.lane.b32.xlu0 %v1398, 16
        %v1407 = vpop.permute.xlu0 %1406
        %1408 = vrot.lane.b32.xlu0 %v1399, 16
        %v1409 = vpop.permute.xlu0 %1408
        %1410 = vrot.lane.b32.xlu0 %v1400, 16
        %v1411 = vpop.permute.xlu0 %1410
        %1412 = vrot.lane.b32.xlu0 %v1401, 16
        %v1413 = vpop.permute.xlu0 %1412
        %1414 = vrot.lane.b32.xlu0 %v1402, 16
        %v1415 = vpop.permute.xlu0 %1414
        %1416 = vrot.lane.b32.xlu0 %v1403, 16
        %v1417 = vpop.permute.xlu0 %1416
        %1418 = vrot.lane.b32.xlu0 %v1404, 16
        %v1419 = vpop.permute.xlu0 %1418
        %1420 = vrot.lane.b32.xlu0 %v1405, 16
        %v1421 = vpop.permute.xlu0 %1420
        %v1422 = vunpack.c.l.b16 %v543
        %v1423 = vunpack.c.l.b16 %v547
        %v1424 = vunpack.c.l.b16 %v551
        %v1425 = vunpack.c.l.b16 %v555
        %v1426 = vunpack.c.l.b16 %v559
        %v1427 = vunpack.c.l.b16 %v563
        %v1428 = vunpack.c.l.b16 %v567
        %v1429 = vunpack.c.l.b16 %v571
        %v1430 = vunpack.c.l.b16 %v575
        %v1431 = vunpack.c.l.b16 %v579
        %v1432 = vunpack.c.l.b16 %v583
        %v1433 = vunpack.c.l.b16 %v587
        %v1434 = vunpack.c.l.b16 %v591
        %v1435 = vunpack.c.l.b16 %v595
        %v1436 = vunpack.c.l.b16 %v599
        %v1437 = vunpack.c.l.b16 %v603
        %v1438 = vpack.c.b16 %v1423, %v1422
        %v1439 = vpack.c.b16 %v1425, %v1424
        %v1440 = vpack.c.b16 %v1427, %v1426
        %v1441 = vpack.c.b16 %v1429, %v1428
        %v1442 = vpack.c.b16 %v1431, %v1430
        %v1443 = vpack.c.b16 %v1433, %v1432
        %v1444 = vpack.c.b16 %v1435, %v1434
        %v1445 = vpack.c.b16 %v1437, %v1436
        %1446 = vrot.lane.b32.xlu0 %v1438, 32
        %v1447 = vpop.permute.xlu0 %1446
        %1448 = vrot.lane.b32.xlu0 %v1439, 32
        %v1449 = vpop.permute.xlu0 %1448
        %1450 = vrot.lane.b32.xlu0 %v1440, 32
        %v1451 = vpop.permute.xlu0 %1450
        %1452 = vrot.lane.b32.xlu0 %v1441, 32
        %v1453 = vpop.permute.xlu0 %1452
        %1454 = vrot.lane.b32.xlu0 %v1442, 32
        %v1455 = vpop.permute.xlu0 %1454
        %1456 = vrot.lane.b32.xlu0 %v1443, 32
        %v1457 = vpop.permute.xlu0 %1456
        %1458 = vrot.lane.b32.xlu0 %v1444, 32
        %v1459 = vpop.permute.xlu0 %1458
        %1460 = vrot.lane.b32.xlu0 %v1445, 32
        %v1461 = vpop.permute.xlu0 %1460
        %v1478 = vunpack.c.l.b16 %v605
        %v1479 = vunpack.c.l.b16 %v606
        %v1480 = vunpack.c.l.b16 %v607
        %v1481 = vunpack.c.l.b16 %v608
        %v1482 = vunpack.c.l.b16 %v609
        %v1483 = vunpack.c.l.b16 %v610
        %v1484 = vunpack.c.l.b16 %v611
        %v1485 = vunpack.c.l.b16 %v612
        %v1486 = vunpack.c.l.b16 %v613
        %v1487 = vunpack.c.l.b16 %v614
        %v1488 = vunpack.c.l.b16 %v615
        %v1489 = vunpack.c.l.b16 %v616
        %v1490 = vunpack.c.l.b16 %v617
        %v1491 = vunpack.c.l.b16 %v618
        %v1492 = vunpack.c.l.b16 %v619
        %v1493 = vunpack.c.l.b16 %v620
        %v1494 = vpack.c.b16 %v1479, %v1478
        %v1495 = vpack.c.b16 %v1481, %v1480
        %v1496 = vpack.c.b16 %v1483, %v1482
        %v1497 = vpack.c.b16 %v1485, %v1484
        %v1498 = vpack.c.b16 %v1487, %v1486
        %v1499 = vpack.c.b16 %v1489, %v1488
        %v1500 = vpack.c.b16 %v1491, %v1490
        %v1501 = vpack.c.b16 %v1493, %v1492
        %1502 = vrot.lane.b32.xlu0 %v1494, 48
        %v1503 = vpop.permute.xlu0 %1502
        %1504 = vrot.lane.b32.xlu0 %v1495, 48
        %v1505 = vpop.permute.xlu0 %1504
        %1506 = vrot.lane.b32.xlu0 %v1496, 48
        %v1507 = vpop.permute.xlu0 %1506
        %1508 = vrot.lane.b32.xlu0 %v1497, 48
        %v1509 = vpop.permute.xlu0 %1508
        %1510 = vrot.lane.b32.xlu0 %v1498, 48
        %v1511 = vpop.permute.xlu0 %1510
        %1512 = vrot.lane.b32.xlu0 %v1499, 48
        %v1513 = vpop.permute.xlu0 %1512
        %1514 = vrot.lane.b32.xlu0 %v1500, 48
        %v1515 = vpop.permute.xlu0 %1514
        %1516 = vrot.lane.b32.xlu0 %v1501, 48
        %v1517 = vpop.permute.xlu0 %1516
        %v1518 = vunpack.c.l.b16 %v650
        %v1519 = vunpack.c.l.b16 %v664
        %v1520 = vunpack.c.l.b16 %v678
        %v1521 = vunpack.c.l.b16 %v692
        %v1522 = vunpack.c.l.b16 %v706
        %v1523 = vunpack.c.l.b16 %v720
        %v1524 = vunpack.c.l.b16 %v734
        %v1525 = vunpack.c.l.b16 %v748
        %v1526 = vunpack.c.l.b16 %v762
        %v1527 = vunpack.c.l.b16 %v776
        %v1528 = vunpack.c.l.b16 %v790
        %v1529 = vunpack.c.l.b16 %v804
        %v1530 = vunpack.c.l.b16 %v818
        %v1531 = vunpack.c.l.b16 %v832
        %v1532 = vunpack.c.l.b16 %v846
        %v1533 = vunpack.c.l.b16 %v860
        %v1534 = vpack.c.b16 %v1519, %v1518
        %v1535 = vpack.c.b16 %v1521, %v1520
        %v1536 = vpack.c.b16 %v1523, %v1522
        %v1537 = vpack.c.b16 %v1525, %v1524
        %v1538 = vpack.c.b16 %v1527, %v1526
        %v1539 = vpack.c.b16 %v1529, %v1528
        %v1540 = vpack.c.b16 %v1531, %v1530
        %v1541 = vpack.c.b16 %v1533, %v1532
        %1542 = vrot.lane.b32.xlu0 %v1534, 64
        %v1543 = vpop.permute.xlu0 %1542
        %1544 = vrot.lane.b32.xlu0 %v1535, 64
        %v1545 = vpop.permute.xlu0 %1544
        %1546 = vrot.lane.b32.xlu0 %v1536, 64
        %v1547 = vpop.permute.xlu0 %1546
        %1548 = vrot.lane.b32.xlu0 %v1537, 64
        %v1549 = vpop.permute.xlu0 %1548
        %1550 = vrot.lane.b32.xlu0 %v1538, 64
        %v1551 = vpop.permute.xlu0 %1550
        %1552 = vrot.lane.b32.xlu0 %v1539, 64
        %v1553 = vpop.permute.xlu0 %1552
        %1554 = vrot.lane.b32.xlu0 %v1540, 64
        %v1555 = vpop.permute.xlu0 %1554
        %1556 = vrot.lane.b32.xlu0 %v1541, 64
        %v1557 = vpop.permute.xlu0 %1556
        %v1558 = vunpack.c.l.b16 %v912
        %v1559 = vunpack.c.l.b16 %v916
        %v1560 = vunpack.c.l.b16 %v920
        %v1561 = vunpack.c.l.b16 %v924
        %v1562 = vunpack.c.l.b16 %v928
        %v1563 = vunpack.c.l.b16 %v932
        %v1564 = vunpack.c.l.b16 %v936
        %v1565 = vunpack.c.l.b16 %v940
        %v1566 = vunpack.c.l.b16 %v944
        %v1567 = vunpack.c.l.b16 %v948
        %v1568 = vunpack.c.l.b16 %v952
        %v1569 = vunpack.c.l.b16 %v956
        %v1570 = vunpack.c.l.b16 %v960
        %v1571 = vunpack.c.l.b16 %v964
        %v1572 = vunpack.c.l.b16 %v968
        %v1573 = vunpack.c.l.b16 %v972
        %v1574 = vpack.c.b16 %v1559, %v1558
        %v1575 = vpack.c.b16 %v1561, %v1560
        %v1576 = vpack.c.b16 %v1563, %v1562
        %v1577 = vpack.c.b16 %v1565, %v1564
        %v1578 = vpack.c.b16 %v1567, %v1566
        %v1579 = vpack.c.b16 %v1569, %v1568
        %v1580 = vpack.c.b16 %v1571, %v1570
        %v1581 = vpack.c.b16 %v1573, %v1572
        %1582 = vrot.lane.b32.xlu0 %v1574, 80
        %v1583 = vpop.permute.xlu0 %1582
        %1584 = vrot.lane.b32.xlu0 %v1575, 80
        %v1585 = vpop.permute.xlu0 %1584
        %1586 = vrot.lane.b32.xlu0 %v1576, 80
        %v1587 = vpop.permute.xlu0 %1586
        %1588 = vrot.lane.b32.xlu0 %v1577, 80
        %v1589 = vpop.permute.xlu0 %1588
        %1590 = vrot.lane.b32.xlu0 %v1578, 80
        %v1591 = vpop.permute.xlu0 %1590
        %1592 = vrot.lane.b32.xlu0 %v1579, 80
        %v1593 = vpop.permute.xlu0 %1592
        %1594 = vrot.lane.b32.xlu0 %v1580, 80
        %v1595 = vpop.permute.xlu0 %1594
        %1596 = vrot.lane.b32.xlu0 %v1581, 80
        %v1597 = vpop.permute.xlu0 %1596
        %v1614 = vunpack.c.l.b16 %v974
        %v1615 = vunpack.c.l.b16 %v975
        %v1616 = vunpack.c.l.b16 %v976
        %v1617 = vunpack.c.l.b16 %v977
        %v1618 = vunpack.c.l.b16 %v978
        %v1619 = vunpack.c.l.b16 %v979
        %v1620 = vunpack.c.l.b16 %v980
        %v1621 = vunpack.c.l.b16 %v981
        %v1622 = vunpack.c.l.b16 %v982
        %v1623 = vunpack.c.l.b16 %v983
        %v1624 = vunpack.c.l.b16 %v984
        %v1625 = vunpack.c.l.b16 %v985
        %v1626 = vunpack.c.l.b16 %v986
        %v1627 = vunpack.c.l.b16 %v987
        %v1628 = vunpack.c.l.b16 %v988
        %v1629 = vunpack.c.l.b16 %v989
        %v1630 = vpack.c.b16 %v1615, %v1614
        %v1631 = vpack.c.b16 %v1617, %v1616
        %v1632 = vpack.c.b16 %v1619, %v1618
        %v1633 = vpack.c.b16 %v1621, %v1620
        %v1634 = vpack.c.b16 %v1623, %v1622
        %v1635 = vpack.c.b16 %v1625, %v1624
        %v1636 = vpack.c.b16 %v1627, %v1626
        %v1637 = vpack.c.b16 %v1629, %v1628
        %1638 = vrot.lane.b32.xlu0 %v1630, 96
        %v1639 = vpop.permute.xlu0 %1638
        %1640 = vrot.lane.b32.xlu0 %v1631, 96
        %v1641 = vpop.permute.xlu0 %1640
        %1642 = vrot.lane.b32.xlu0 %v1632, 96
        %v1643 = vpop.permute.xlu0 %1642
        %1644 = vrot.lane.b32.xlu0 %v1633, 96
        %v1645 = vpop.permute.xlu0 %1644
        %1646 = vrot.lane.b32.xlu0 %v1634, 96
        %v1647 = vpop.permute.xlu0 %1646
        %1648 = vrot.lane.b32.xlu0 %v1635, 96
        %v1649 = vpop.permute.xlu0 %1648
        %1650 = vrot.lane.b32.xlu0 %v1636, 96
        %v1651 = vpop.permute.xlu0 %1650
        %1652 = vrot.lane.b32.xlu0 %v1637, 96
        %v1653 = vpop.permute.xlu0 %1652
        %v1654 = vunpack.c.l.b16 %v1019
        %v1655 = vunpack.c.l.b16 %v1033
        %v1656 = vunpack.c.l.b16 %v1047
        %v1657 = vunpack.c.l.b16 %v1061
        %v1658 = vunpack.c.l.b16 %v1075
        %v1659 = vunpack.c.l.b16 %v1089
        %v1660 = vunpack.c.l.b16 %v1103
        %v1661 = vunpack.c.l.b16 %v1117
        %v1662 = vunpack.c.l.b16 %v1131
        %v1663 = vunpack.c.l.b16 %v1145
        %v1664 = vunpack.c.l.b16 %v1159
        %v1665 = vunpack.c.l.b16 %v1173
        %v1666 = vunpack.c.l.b16 %v1187
        %v1667 = vunpack.c.l.b16 %v1201
        %v1668 = vunpack.c.l.b16 %v1215
        %v1669 = vunpack.c.l.b16 %v1229
        %v1670 = vpack.c.b16 %v1655, %v1654
        %v1671 = vpack.c.b16 %v1657, %v1656
        %v1672 = vpack.c.b16 %v1659, %v1658
        %v1673 = vpack.c.b16 %v1661, %v1660
        %v1674 = vpack.c.b16 %v1663, %v1662
        %v1675 = vpack.c.b16 %v1665, %v1664
        %v1676 = vpack.c.b16 %v1667, %v1666
        %v1677 = vpack.c.b16 %v1669, %v1668
        %1678 = vrot.lane.b32.xlu0 %v1670, 112
        %v1679 = vpop.permute.xlu0 %1678
        %1680 = vrot.lane.b32.xlu0 %v1671, 112
        %v1681 = vpop.permute.xlu0 %1680
        %1682 = vrot.lane.b32.xlu0 %v1672, 112
        %v1683 = vpop.permute.xlu0 %1682
        %1684 = vrot.lane.b32.xlu0 %v1673, 112
        %v1685 = vpop.permute.xlu0 %1684
        %1686 = vrot.lane.b32.xlu0 %v1674, 112
        %v1687 = vpop.permute.xlu0 %1686
        %1688 = vrot.lane.b32.xlu0 %v1675, 112
        %v1689 = vpop.permute.xlu0 %1688
        %1690 = vrot.lane.b32.xlu0 %v1676, 112
        %v1691 = vpop.permute.xlu0 %1690
        %1692 = vrot.lane.b32.xlu0 %v1677, 112
        %v1693 = vpop.permute.xlu0 %1692
        %v1694 = vunpack.c.l.b16 %v1281
        %v1695 = vunpack.c.l.b16 %v1285
        %v1696 = vunpack.c.l.b16 %v1289
        %v1697 = vunpack.c.l.b16 %v1293
        %v1698 = vunpack.c.l.b16 %v1297
        %v1699 = vunpack.c.l.b16 %v1301
        %v1700 = vunpack.c.l.b16 %v1305
        %v1701 = vunpack.c.l.b16 %v1309
        %v1702 = vunpack.c.l.b16 %v1313
        %v1703 = vunpack.c.l.b16 %v1317
        %v1704 = vunpack.c.l.b16 %v1321
        %v1705 = vunpack.c.l.b16 %v1325
        %v1706 = vunpack.c.l.b16 %v1329
        %v1707 = vunpack.c.l.b16 %v1333
        %v1708 = vunpack.c.l.b16 %v1337
        %v1709 = vunpack.c.l.b16 %v1341
        %v1710 = vpack.c.b16 %v1695, %v1694
        %v1711 = vpack.c.b16 %v1697, %v1696
        %v1712 = vpack.c.b16 %v1699, %v1698
        %v1713 = vpack.c.b16 %v1701, %v1700
        %v1714 = vpack.c.b16 %v1703, %v1702
        %v1715 = vpack.c.b16 %v1705, %v1704
        %v1716 = vpack.c.b16 %v1707, %v1706
        %v1717 = vpack.c.b16 %v1709, %v1708
        %vm1718 = vcmask 130048
        %v1721 = vsel %vm1718, %v1374, %v1407
        %v1724 = vsel %vm1718, %v1375, %v1409
        %v1727 = vsel %vm1718, %v1376, %v1411
        %v1730 = vsel %vm1718, %v1377, %v1413
        %v1733 = vsel %vm1718, %v1378, %v1415
        %v1736 = vsel %vm1718, %v1379, %v1417
        %v1739 = vsel %vm1718, %v1380, %v1419
        %v1742 = vsel %vm1718, %v1381, %v1421
        %vm1743 = vcmask 261120
        %v1745 = vsel %vm1743, %v1721, %v1447
        %v1747 = vsel %vm1743, %v1724, %v1449
        %v1749 = vsel %vm1743, %v1727, %v1451
        %v1751 = vsel %vm1743, %v1730, %v1453
        %v1753 = vsel %vm1743, %v1733, %v1455
        %v1755 = vsel %vm1743, %v1736, %v1457
        %v1757 = vsel %vm1743, %v1739, %v1459
        %v1759 = vsel %vm1743, %v1742, %v1461
        %vm1760 = vcmask 392192
        %v1762 = vsel %vm1760, %v1745, %v1503
        %v1764 = vsel %vm1760, %v1747, %v1505
        %v1766 = vsel %vm1760, %v1749, %v1507
        %v1768 = vsel %vm1760, %v1751, %v1509
        %v1770 = vsel %vm1760, %v1753, %v1511
        %v1772 = vsel %vm1760, %v1755, %v1513
        %v1774 = vsel %vm1760, %v1757, %v1515
        %v1776 = vsel %vm1760, %v1759, %v1517
        %vm1777 = vcmask 523264
        %v1779 = vsel %vm1777, %v1762, %v1543
        %v1781 = vsel %vm1777, %v1764, %v1545
        %v1783 = vsel %vm1777, %v1766, %v1547
        %v1785 = vsel %vm1777, %v1768, %v1549
        %v1787 = vsel %vm1777, %v1770, %v1551
        %v1789 = vsel %vm1777, %v1772, %v1553
        %v1791 = vsel %vm1777, %v1774, %v1555
        %v1793 = vsel %vm1777, %v1776, %v1557
        %vm1794 = vcmask 654336
        %v1796 = vsel %vm1794, %v1779, %v1583
        %v1798 = vsel %vm1794, %v1781, %v1585
        %v1800 = vsel %vm1794, %v1783, %v1587
        %v1802 = vsel %vm1794, %v1785, %v1589
        %v1804 = vsel %vm1794, %v1787, %v1591
        %v1806 = vsel %vm1794, %v1789, %v1593
        %v1808 = vsel %vm1794, %v1791, %v1595
        %v1810 = vsel %vm1794, %v1793, %v1597
        %vm1811 = vcmask 785408
        %v1813 = vsel %vm1811, %v1796, %v1639
        %v1815 = vsel %vm1811, %v1798, %v1641
        %v1817 = vsel %vm1811, %v1800, %v1643
        %v1819 = vsel %vm1811, %v1802, %v1645
        %v1821 = vsel %vm1811, %v1804, %v1647
        %v1823 = vsel %vm1811, %v1806, %v1649
        %v1825 = vsel %vm1811, %v1808, %v1651
        %v1827 = vsel %vm1811, %v1810, %v1653
        %vm1828 = vcmask 916480
        %v1830 = vsel %vm1828, %v1813, %v1679
        %v1833 = vsel %vm1828, %v1815, %v1681
        %v1836 = vsel %vm1828, %v1817, %v1683
        %v1839 = vsel %vm1828, %v1819, %v1685
        %v1842 = vsel %vm1828, %v1821, %v1687
        %v1845 = vsel %vm1828, %v1823, %v1689
        %v1848 = vsel %vm1828, %v1825, %v1691
        %v1851 = vsel %vm1828, %v1827, %v1693
        %v1853 = vld [vmem:[%s1] sm:$0xf]
        %v1854 = vld [vmem:[%s1 + $0x4] sm:$0xf]
        %v1855 = vld [vmem:[%s1 + $0x8] sm:$0xf]
        %v1856 = vld [vmem:[%s1 + $0xc] sm:$0xf]
        %v1857 = vld [vmem:[%s1 + $0x10] sm:$0xf]
        %v1858 = vld [vmem:[%s1 + $0x14] sm:$0xf]
        %v1859 = vld [vmem:[%s1 + $0x18] sm:$0xf]
        %v1860 = vld [vmem:[%s1 + $0x1c] sm:$0xf]
        %v1861 = vld [vmem:[%s1 + $0x20] sm:$0xf]
        %v1862 = vld [vmem:[%s1 + $0x24] sm:$0xf]
        %v1863 = vld [vmem:[%s1 + $0x28] sm:$0xf]
        %v1864 = vld [vmem:[%s1 + $0x2c] sm:$0xf]
        %v1865 = vld [vmem:[%s1 + $0x30] sm:$0xf]
        %v1866 = vld [vmem:[%s1 + $0x34] sm:$0xf]
        %v1867 = vld [vmem:[%s1 + $0x38] sm:$0xf]
        %v1868 = vld [vmem:[%s1 + $0x3c] sm:$0xf]
        %v1869 = vld [vmem:[%s1 + $0x40] sm:$0xf]
        %v1870 = vld [vmem:[%s1 + $0x44] sm:$0xf]
        %v1871 = vld [vmem:[%s2] sm:$0x1]
        %v1873 = vlaneseq
        %v1874 = vshrl.u32 %v1873, 7
        %v1875 = vsub.s32 0, %v1874
        %v1876 = vrot.slane %v1871, %v1875
        %v1896 = vunpack.c.l.b16 %v1853
        %v1897 = vunpack.c.l.b16 %v1854
        %v1898 = vunpack.c.l.b16 %v1855
        %v1899 = vunpack.c.l.b16 %v1856
        %v1900 = vunpack.c.l.b16 %v1857
        %v1901 = vunpack.c.l.b16 %v1858
        %v1902 = vunpack.c.l.b16 %v1859
        %v1903 = vunpack.c.l.b16 %v1860
        %v1904 = vunpack.c.l.b16 %v1861
        %v1905 = vunpack.c.l.b16 %v1862
        %v1906 = vunpack.c.l.b16 %v1863
        %v1907 = vunpack.c.l.b16 %v1864
        %v1908 = vunpack.c.l.b16 %v1865
        %v1909 = vunpack.c.l.b16 %v1866
        %v1910 = vunpack.c.l.b16 %v1867
        %v1911 = vunpack.c.l.b16 %v1868
        %v1912 = vunpack.c.l.b16 %v1869
        %v1913 = vunpack.c.l.b16 %v1870
        %v1914 = vpack.c.b16 %v1897, %v1896
        %v1915 = vpack.c.b16 %v1899, %v1898
        %v1916 = vpack.c.b16 %v1901, %v1900
        %v1917 = vpack.c.b16 %v1903, %v1902
        %v1918 = vpack.c.b16 %v1905, %v1904
        %v1919 = vpack.c.b16 %v1907, %v1906
        %v1920 = vpack.c.b16 %v1909, %v1908
        %v1921 = vpack.c.b16 %v1911, %v1910
        %v1922 = vpack.c.b16 %v1913, %v1912
        %v1933 = vsel %vm1718, %v1710, 0
        %v1936 = vsel %vm1718, %v1711, 0
        %v1939 = vsel %vm1718, %v1712, 0
        %v1942 = vsel %vm1718, %v1713, 0
        %v1945 = vsel %vm1718, %v1714, 0
        %v1948 = vsel %vm1718, %v1715, 0
        %v1951 = vsel %vm1718, %v1716, 0
        %v1954 = vsel %vm1718, %v1717, 0
        %1956 = vmatprep.subr.bf16.mxu0 0
        %1957 = vmatpush1.bf16.msra.mxu0 %v1921
        %1958 = vmatprep.subr.bf16.mxu0 0
        %1959 = vmatpush1.bf16.msra.mxu0 %v1920
        %1960 = vmatprep.subr.bf16.mxu0 0
        %1961 = vmatpush1.bf16.msra.mxu0 %v1919
        %1962 = vmatprep.subr.bf16.mxu0 0
        %1963 = vmatpush1.bf16.msra.mxu0 %v1918
        %1964 = vmatprep.subr.bf16.mxu0 0
        %1965 = vmatpush1.bf16.msra.mxu0 %v1917
        %1966 = vmatprep.subr.bf16.mxu0 0
        %1967 = vmatpush1.bf16.msra.mxu0 %v1916
        %1968 = vmatprep.subr.bf16.mxu0 0
        %1969 = vmatpush1.bf16.msra.mxu0 %v1915
        %1970 = vmatprep.subr.bf16.mxu0 0
        %1971 = vmatpush1.bf16.msra.mxu0 %v1914
        %1972 = vmatprep.subr.bf16.mxu0 0
        %1973 = vmatpush2.bf16.msra.mxu0 0
        %1974 = vmatprep.subr.bf16.mxu0 0
        %1975 = vmatpush2.bf16.msra.mxu0 0
        %1976 = vmatprep.subr.bf16.mxu0 0
        %1977 = vmatpush2.bf16.msra.mxu0 0
        %1978 = vmatprep.subr.bf16.mxu0 0
        %1979 = vmatpush2.bf16.msra.mxu0 0
        %1980 = vmatprep.subr.bf16.mxu0 0
        %1981 = vmatpush2.bf16.msra.mxu0 0
        %1982 = vmatprep.subr.bf16.mxu0 0
        %1983 = vmatpush2.bf16.msra.mxu0 0
        %1984 = vmatprep.subr.bf16.mxu0 0
        %1985 = vmatpush2.bf16.msra.mxu0 0
        %1986 = vmatprep.subr.bf16.mxu0 0
        %1987 = vmatpush2.bf16.msra.mxu0 %v1922
        %1988 = vmatprep.mubr.bf16.mxu0 %v1933
        %1989 = vmatmul.mubr.bf16.gmra.mxu0 %v1830
        %v1990 = vpop.f32.mrf.mxu0
        %v1991 = vadd.f32 %v1876, %v1990
        %v1992 = vpop.f32.mrf.mxu0
        %v1993 = vpop.f32.mrf.mxu0
        %v1994 = vadd.f32 %v1876, %v1993
        %v1995 = vpop.f32.mrf.mxu0
        %1996 = vmatprep.mubr.bf16.mxu0 %v1936
        %1997 = vmatmul.mubr.bf16.gmra.mxu0 %v1833
        %v1998 = vpop.f32.mrf.mxu0
        %v1999 = vadd.f32 %v1876, %v1998
        %v2000 = vpop.f32.mrf.mxu0
        %v2001 = vpop.f32.mrf.mxu0
        %v2002 = vadd.f32 %v1876, %v2001
        %v2003 = vpop.f32.mrf.mxu0
        %2004 = vmatprep.mubr.bf16.mxu0 %v1939
        %2005 = vmatmul.mubr.bf16.gmra.mxu0 %v1836
        %v2006 = vpop.f32.mrf.mxu0
        %v2007 = vadd.f32 %v1876, %v2006
        %v2008 = vpop.f32.mrf.mxu0
        %v2009 = vpop.f32.mrf.mxu0
        %v2010 = vadd.f32 %v1876, %v2009
        %v2011 = vpop.f32.mrf.mxu0
        %2012 = vmatprep.mubr.bf16.mxu0 %v1942
        %2013 = vmatmul.mubr.bf16.gmra.mxu0 %v1839
        %v2014 = vpop.f32.mrf.mxu0
        %v2015 = vadd.f32 %v1876, %v2014
        %v2016 = vpop.f32.mrf.mxu0
        %v2017 = vpop.f32.mrf.mxu0
        %v2018 = vadd.f32 %v1876, %v2017
        %v2019 = vpop.f32.mrf.mxu0
        %2020 = vmatprep.mubr.bf16.mxu0 %v1945
        %2021 = vmatmul.mubr.bf16.gmra.mxu0 %v1842
        %v2022 = vpop.f32.mrf.mxu0
        %v2023 = vadd.f32 %v1876, %v2022
        %v2024 = vpop.f32.mrf.mxu0
        %v2025 = vpop.f32.mrf.mxu0
        %v2026 = vadd.f32 %v1876, %v2025
        %v2027 = vpop.f32.mrf.mxu0
        %2028 = vmatprep.mubr.bf16.mxu0 %v1948
        %2029 = vmatmul.mubr.bf16.gmra.mxu0 %v1845
        %v2030 = vpop.f32.mrf.mxu0
        %v2031 = vadd.f32 %v1876, %v2030
        %v2032 = vpop.f32.mrf.mxu0
        %v2033 = vpop.f32.mrf.mxu0
        %v2034 = vadd.f32 %v1876, %v2033
        %v2035 = vpop.f32.mrf.mxu0
        %2036 = vmatprep.mubr.bf16.mxu0 %v1951
        %2037 = vmatmul.mubr.bf16.gmra.mxu0 %v1848
        %v2038 = vpop.f32.mrf.mxu0
        %v2039 = vadd.f32 %v1876, %v2038
        %v2040 = vpop.f32.mrf.mxu0
        %v2041 = vpop.f32.mrf.mxu0
        %v2042 = vadd.f32 %v1876, %v2041
        %v2043 = vpop.f32.mrf.mxu0
        %2044 = vmatprep.mubr.bf16.mxu0 %v1954
        %2045 = vmatmul.mubr.bf16.gmra.mxu0 %v1851
        %v2046 = vpop.f32.mrf.mxu0
        %v2047 = vadd.f32 %v1876, %v2046
        %v2048 = vpop.f32.mrf.mxu0
        %v2049 = vpop.f32.mrf.mxu0
        %v2050 = vadd.f32 %v1876, %v2049
        %v2051 = vpop.f32.mrf.mxu0
        %2052 = vdwg.mxu0
        %v2053 = vmax.f32 %v1991, 0.0
        %v2054 = vmax.f32 %v1994, 0.0
        %v2055 = vmax.f32 %v1999, 0.0
        %v2056 = vmax.f32 %v2002, 0.0
        %v2057 = vmax.f32 %v2007, 0.0
        %v2058 = vmax.f32 %v2010, 0.0
        %v2059 = vmax.f32 %v2015, 0.0
        %v2060 = vmax.f32 %v2018, 0.0
        %v2061 = vmax.f32 %v2023, 0.0
        %v2062 = vmax.f32 %v2026, 0.0
        %v2063 = vmax.f32 %v2031, 0.0
        %v2064 = vmax.f32 %v2034, 0.0
        %v2065 = vmax.f32 %v2039, 0.0
        %v2066 = vmax.f32 %v2042, 0.0
        %v2067 = vmax.f32 %v2047, 0.0
        %v2068 = vmax.f32 %v2050, 0.0
        %v2069 = vpack.c.bf16 %v2054, %v2053
        %v2070 = vpack.c.bf16 %v2056, %v2055
        %v2071 = vpack.c.bf16 %v2058, %v2057
        %v2072 = vpack.c.bf16 %v2060, %v2059
        %v2073 = vpack.c.bf16 %v2062, %v2061
        %v2074 = vpack.c.bf16 %v2064, %v2063
        %v2075 = vpack.c.bf16 %v2066, %v2065
        %v2076 = vpack.c.bf16 %v2068, %v2067
        %v2077 = vld [vmem:[%s3] sm:$0xf]
        %v2078 = vld [vmem:[%s3 + $0x4] sm:$0xf]
        %v2079 = vld [vmem:[%s3 + $0x8] sm:$0xf]
        %v2080 = vld [vmem:[%s3 + $0xc] sm:$0xf]
        %v2081 = vld [vmem:[%s3 + $0x10] sm:$0xf]
        %v2082 = vld [vmem:[%s3 + $0x14] sm:$0xf]
        %v2083 = vld [vmem:[%s3 + $0x18] sm:$0xf]
        %v2084 = vld [vmem:[%s3 + $0x1c] sm:$0xf]
        %v2085 = vld [vmem:[%s3 + $0x20] sm:$0xf]
        %v2086 = vld [vmem:[%s3 + $0x24] sm:$0xf]
        %v2087 = vld [vmem:[%s3 + $0x28] sm:$0xf]
        %v2088 = vld [vmem:[%s3 + $0x2c] sm:$0xf]
        %v2089 = vld [vmem:[%s3 + $0x30] sm:$0xf]
        %v2090 = vld [vmem:[%s3 + $0x34] sm:$0xf]
        %v2091 = vld [vmem:[%s3 + $0x38] sm:$0xf]
        %v2092 = vld [vmem:[%s3 + $0x3c] sm:$0xf]
        %v2093 = vld [vmem:[%s4] sm:$0x1]
        %v2095 = vlaneseq
        %v2096 = vshrl.u32 %v2095, 7
        %v2097 = vsub.s32 0, %v2096
        %v2098 = vrot.slane %v2093, %v2097
        %v2116 = vunpack.c.l.b16 %v2077
        %v2117 = vunpack.c.l.b16 %v2078
        %v2118 = vunpack.c.l.b16 %v2079
        %v2119 = vunpack.c.l.b16 %v2080
        %v2120 = vunpack.c.l.b16 %v2081
        %v2121 = vunpack.c.l.b16 %v2082
        %v2122 = vunpack.c.l.b16 %v2083
        %v2123 = vunpack.c.l.b16 %v2084
        %v2124 = vunpack.c.l.b16 %v2085
        %v2125 = vunpack.c.l.b16 %v2086
        %v2126 = vunpack.c.l.b16 %v2087
        %v2127 = vunpack.c.l.b16 %v2088
        %v2128 = vunpack.c.l.b16 %v2089
        %v2129 = vunpack.c.l.b16 %v2090
        %v2130 = vunpack.c.l.b16 %v2091
        %v2131 = vunpack.c.l.b16 %v2092
        %v2132 = vpack.c.b16 %v2117, %v2116
        %v2133 = vpack.c.b16 %v2119, %v2118
        %v2134 = vpack.c.b16 %v2121, %v2120
        %v2135 = vpack.c.b16 %v2123, %v2122
        %v2136 = vpack.c.b16 %v2125, %v2124
        %v2137 = vpack.c.b16 %v2127, %v2126
        %v2138 = vpack.c.b16 %v2129, %v2128
        %v2139 = vpack.c.b16 %v2131, %v2130
        %2148 = vmatprep.subr.bf16.mxu0 0
        %2149 = vmatpush1.bf16.msra.mxu0 %v2139
        %2150 = vmatprep.subr.bf16.mxu0 0
        %2151 = vmatpush1.bf16.msra.mxu0 %v2138
        %2152 = vmatprep.subr.bf16.mxu0 0
        %2153 = vmatpush1.bf16.msra.mxu0 %v2137
        %2154 = vmatprep.subr.bf16.mxu0 0
        %2155 = vmatpush1.bf16.msra.mxu0 %v2136
        %2156 = vmatprep.subr.bf16.mxu0 0
        %2157 = vmatpush1.bf16.msra.mxu0 %v2135
        %2158 = vmatprep.subr.bf16.mxu0 0
        %2159 = vmatpush1.bf16.msra.mxu0 %v2134
        %2160 = vmatprep.subr.bf16.mxu0 0
        %2161 = vmatpush1.bf16.msra.mxu0 %v2133
        %2162 = vmatprep.subr.bf16.mxu0 0
        %2163 = vmatpush1.bf16.msra.mxu0 %v2132
        %2164 = vmatprep.subr.bf16.mxu0 0
        %2165 = vmatpush2.bf16.msra.mxu0 0
        %2166 = vmatprep.subr.bf16.mxu0 0
        %2167 = vmatpush2.bf16.msra.mxu0 0
        %2168 = vmatprep.subr.bf16.mxu0 0
        %2169 = vmatpush2.bf16.msra.mxu0 0
        %2170 = vmatprep.subr.bf16.mxu0 0
        %2171 = vmatpush2.bf16.msra.mxu0 0
        %2172 = vmatprep.subr.bf16.mxu0 0
        %2173 = vmatpush2.bf16.msra.mxu0 0
        %2174 = vmatprep.subr.bf16.mxu0 0
        %2175 = vmatpush2.bf16.msra.mxu0 0
        %2176 = vmatprep.subr.bf16.mxu0 0
        %2177 = vmatpush2.bf16.msra.mxu0 0
        %2178 = vmatprep.subr.bf16.mxu0 0
        %2179 = vmatpush2.bf16.msra.mxu0 0
        %2180 = vmatprep.mubr.bf16.mxu0 0
        %2181 = vmatmul.mubr.bf16.gmra.mxu0 %v2069
        %v2182 = vpop.f32.mrf.mxu0
        %v2183 = vadd.f32 %v2098, %v2182
        %v2184 = vpop.f32.mrf.mxu0
        %v2185 = vpop.f32.mrf.mxu0
        %v2186 = vadd.f32 %v2098, %v2185
        %v2187 = vpop.f32.mrf.mxu0
        %2188 = vmatprep.mubr.bf16.mxu0 0
        %2189 = vmatmul.mubr.bf16.gmra.mxu0 %v2070
        %v2190 = vpop.f32.mrf.mxu0
        %v2191 = vadd.f32 %v2098, %v2190
        %v2192 = vpop.f32.mrf.mxu0
        %v2193 = vpop.f32.mrf.mxu0
        %v2194 = vadd.f32 %v2098, %v2193
        %v2195 = vpop.f32.mrf.mxu0
        %2196 = vmatprep.mubr.bf16.mxu0 0
        %2197 = vmatmul.mubr.bf16.gmra.mxu0 %v2071
        %v2198 = vpop.f32.mrf.mxu0
        %v2199 = vadd.f32 %v2098, %v2198
        %v2200 = vpop.f32.mrf.mxu0
        %v2201 = vpop.f32.mrf.mxu0
        %v2202 = vadd.f32 %v2098, %v2201
        %v2203 = vpop.f32.mrf.mxu0
        %2204 = vmatprep.mubr.bf16.mxu0 0
        %2205 = vmatmul.mubr.bf16.gmra.mxu0 %v2072
        %v2206 = vpop.f32.mrf.mxu0
        %v2207 = vadd.f32 %v2098, %v2206
        %v2208 = vpop.f32.mrf.mxu0
        %v2209 = vpop.f32.mrf.mxu0
        %v2210 = vadd.f32 %v2098, %v2209
        %v2211 = vpop.f32.mrf.mxu0
        %2212 = vmatprep.mubr.bf16.mxu0 0
        %2213 = vmatmul.mubr.bf16.gmra.mxu0 %v2073
        %v2214 = vpop.f32.mrf.mxu0
        %v2215 = vadd.f32 %v2098, %v2214
        %v2216 = vpop.f32.mrf.mxu0
        %v2217 = vpop.f32.mrf.mxu0
        %v2218 = vadd.f32 %v2098, %v2217
        %v2219 = vpop.f32.mrf.mxu0
        %2220 = vmatprep.mubr.bf16.mxu0 0
        %2221 = vmatmul.mubr.bf16.gmra.mxu0 %v2074
        %v2222 = vpop.f32.mrf.mxu0
        %v2223 = vadd.f32 %v2098, %v2222
        %v2224 = vpop.f32.mrf.mxu0
        %v2225 = vpop.f32.mrf.mxu0
        %v2226 = vadd.f32 %v2098, %v2225
        %v2227 = vpop.f32.mrf.mxu0
        %2228 = vmatprep.mubr.bf16.mxu0 0
        %2229 = vmatmul.mubr.bf16.gmra.mxu0 %v2075
        %v2230 = vpop.f32.mrf.mxu0
        %v2231 = vadd.f32 %v2098, %v2230
        %v2232 = vpop.f32.mrf.mxu0
        %v2233 = vpop.f32.mrf.mxu0
        %v2234 = vadd.f32 %v2098, %v2233
        %v2235 = vpop.f32.mrf.mxu0
        %2236 = vmatprep.mubr.bf16.mxu0 0
        %2237 = vmatmul.mubr.bf16.gmra.mxu0 %v2076
        %v2238 = vpop.f32.mrf.mxu0
        %v2239 = vadd.f32 %v2098, %v2238
        %v2240 = vpop.f32.mrf.mxu0
        %v2241 = vpop.f32.mrf.mxu0
        %v2242 = vadd.f32 %v2098, %v2241
        %v2243 = vpop.f32.mrf.mxu0
        %2244 = vdwg.mxu0
        %v2245 = vlaneseq
        %v2246 = vand.u32 %v2245, 127
        %vm2247 = vcmp.ge.s32.totalorder %v2246, 54
        %vm2248 = vcmp.lt.s32.totalorder %v2246, 63
        %vm2249 = vmand %vm2247, %vm2248
        %v2250 = vsel %vm2249, %v2183, 0.0
        %v2251 = vsel %vm2249, %v2186, 0.0
        %v2252 = vsel %vm2249, %v2191, 0.0
        %v2253 = vsel %vm2249, %v2194, 0.0
        %v2254 = vsel %vm2249, %v2199, 0.0
        %v2255 = vsel %vm2249, %v2202, 0.0
        %v2256 = vsel %vm2249, %v2207, 0.0
        %v2257 = vsel %vm2249, %v2210, 0.0
        %v2258 = vsel %vm2249, %v2215, 0.0
        %v2259 = vsel %vm2249, %v2218, 0.0
        %v2260 = vsel %vm2249, %v2223, 0.0
        %v2261 = vsel %vm2249, %v2226, 0.0
        %v2262 = vsel %vm2249, %v2231, 0.0
        %v2263 = vsel %vm2249, %v2234, 0.0
        %v2264 = vsel %vm2249, %v2239, 0.0
        %v2265 = vsel %vm2249, %v2242, 0.0
        %v2266 = vsub.f32 0.0, %v2250
        %v2267 = vsub.f32 0.0, %v2251
        %v2268 = vsub.f32 0.0, %v2252
        %v2269 = vsub.f32 0.0, %v2253
        %v2270 = vsub.f32 0.0, %v2254
        %v2271 = vsub.f32 0.0, %v2255
        %v2272 = vsub.f32 0.0, %v2256
        %v2273 = vsub.f32 0.0, %v2257
        %v2274 = vsub.f32 0.0, %v2258
        %v2275 = vsub.f32 0.0, %v2259
        %v2276 = vsub.f32 0.0, %v2260
        %v2277 = vsub.f32 0.0, %v2261
        %v2278 = vsub.f32 0.0, %v2262
        %v2279 = vsub.f32 0.0, %v2263
        %v2280 = vsub.f32 0.0, %v2264
        %v2281 = vsub.f32 0.0, %v2265
        %v2282 = vmul.f32 %v2266, 1.442695
        %v2283 = vpow.pop %v2282
        %v2284 = vmul.f32 %v2267, 1.442695
        %v2285 = vpow.pop %v2284
        %v2286 = vmul.f32 %v2268, 1.442695
        %v2287 = vpow.pop %v2286
        %v2288 = vmul.f32 %v2269, 1.442695
        %v2289 = vpow.pop %v2288
        %v2290 = vmul.f32 %v2270, 1.442695
        %v2291 = vpow.pop %v2290
        %v2292 = vmul.f32 %v2271, 1.442695
        %v2293 = vpow.pop %v2292
        %v2294 = vmul.f32 %v2272, 1.442695
        %v2295 = vpow.pop %v2294
        %v2296 = vmul.f32 %v2273, 1.442695
        %v2297 = vpow.pop %v2296
        %v2298 = vmul.f32 %v2274, 1.442695
        %v2299 = vpow.pop %v2298
        %v2300 = vmul.f32 %v2275, 1.442695
        %v2301 = vpow.pop %v2300
        %v2302 = vmul.f32 %v2276, 1.442695
        %v2303 = vpow.pop %v2302
        %v2304 = vmul.f32 %v2277, 1.442695
        %v2305 = vpow.pop %v2304
        %v2306 = vmul.f32 %v2278, 1.442695
        %v2307 = vpow.pop %v2306
        %v2308 = vmul.f32 %v2279, 1.442695
        %v2309 = vpow.pop %v2308
        %v2310 = vmul.f32 %v2280, 1.442695
        %v2311 = vpow.pop %v2310
        %v2312 = vmul.f32 %v2281, 1.442695
        %v2313 = vpow.pop %v2312
        %v2314 = vadd.f32 %v2283, 1.0
        %v2315 = vadd.f32 %v2285, 1.0
        %v2316 = vadd.f32 %v2287, 1.0
        %v2317 = vadd.f32 %v2289, 1.0
        %v2318 = vadd.f32 %v2291, 1.0
        %v2319 = vadd.f32 %v2293, 1.0
        %v2320 = vadd.f32 %v2295, 1.0
        %v2321 = vadd.f32 %v2297, 1.0
        %v2322 = vadd.f32 %v2299, 1.0
        %v2323 = vadd.f32 %v2301, 1.0
        %v2324 = vadd.f32 %v2303, 1.0
        %v2325 = vadd.f32 %v2305, 1.0
        %v2326 = vadd.f32 %v2307, 1.0
        %v2327 = vadd.f32 %v2309, 1.0
        %v2328 = vadd.f32 %v2311, 1.0
        %v2329 = vadd.f32 %v2313, 1.0
        %v2330 = vrcp.pop %v2314
        %v2331 = vrcp.pop %v2315
        %v2332 = vrcp.pop %v2316
        %v2333 = vrcp.pop %v2317
        %v2334 = vrcp.pop %v2318
        %v2335 = vrcp.pop %v2319
        %v2336 = vrcp.pop %v2320
        %v2337 = vrcp.pop %v2321
        %v2338 = vrcp.pop %v2322
        %v2339 = vrcp.pop %v2323
        %v2340 = vrcp.pop %v2324
        %v2341 = vrcp.pop %v2325
        %v2342 = vrcp.pop %v2326
        %v2343 = vrcp.pop %v2327
        %v2344 = vrcp.pop %v2328
        %v2345 = vrcp.pop %v2329
        %v2346 = vsel %vm2249, %v2330, %v2183
        %v2347 = vsel %vm2249, %v2331, %v2186
        %v2348 = vsel %vm2249, %v2332, %v2191
        %v2349 = vsel %vm2249, %v2333, %v2194
        %v2350 = vsel %vm2249, %v2334, %v2199
        %v2351 = vsel %vm2249, %v2335, %v2202
        %v2352 = vsel %vm2249, %v2336, %v2207
        %v2353 = vsel %vm2249, %v2337, %v2210
        %v2354 = vsel %vm2249, %v2338, %v2215
        %v2355 = vsel %vm2249, %v2339, %v2218
        %v2356 = vsel %vm2249, %v2340, %v2223
        %v2357 = vsel %vm2249, %v2341, %v2226
        %v2358 = vsel %vm2249, %v2342, %v2231
        %v2359 = vsel %vm2249, %v2343, %v2234
        %v2360 = vsel %vm2249, %v2344, %v2239
        %v2361 = vsel %vm2249, %v2345, %v2242
        %2362 = vst [vmem:[%s220] sm:$0xff] %v2346
        %2363 = vst [vmem:[%s220 + $0x8] sm:$0xff] %v2347
        %2364 = vst [vmem:[%s220 + $0x10] sm:$0xff] %v2348
        %2365 = vst [vmem:[%s220 + $0x18] sm:$0xff] %v2349
        %2366 = vst [vmem:[%s220 + $0x20] sm:$0xff] %v2350
        %2367 = vst [vmem:[%s220 + $0x28] sm:$0xff] %v2351
        %2368 = vst [vmem:[%s220 + $0x30] sm:$0xff] %v2352
        %2369 = vst [vmem:[%s220 + $0x38] sm:$0xff] %v2353
        %2370 = vst [vmem:[%s220 + $0x40] sm:$0xff] %v2354
        %2371 = vst [vmem:[%s220 + $0x48] sm:$0xff] %v2355
        %2372 = vst [vmem:[%s220 + $0x50] sm:$0xff] %v2356
        %2373 = vst [vmem:[%s220 + $0x58] sm:$0xff] %v2357
        %2374 = vst [vmem:[%s220 + $0x60] sm:$0xff] %v2358
        %2375 = vst [vmem:[%s220 + $0x68] sm:$0xff] %v2359
        %2376 = vst [vmem:[%s220 + $0x70] sm:$0xff] %v2360
        %2377 = vst [vmem:[%s220 + $0x78] sm:$0xff] %v2361
        %s2378 = sand.u32 %s137, 1
        %s2379 = scalar_lea.sflag [#allocation3], %s2378
        %s2380 = sand.u32 %s137, 1
        %s2381 = smul.addr %s2380, 128
        %s2382 = scalar_lea.vmem [#allocation2], %s2381
        // Predicated region
        $region41: #{tpu_custom_call.1} parent=39 // pred_check
          %p2383 = pneg %p147
        $region42: #{tpu_custom_call.1} parent=39 // pred_check_branch
          %2385 = sbr.rel (%p2383) target = $region44
        $region43: #{tpu_custom_call.1} parent=39 // pred_region
          %s2386 = smul.u32 2, %s19
          %s2388 = ssub.s32 2048, 2048
          %2389 = vsyncadd %s2379, %s2388
          %s2390 = smul.addr %s2386, 8
          %s2391 = smul.addr %s2390, 128
          %s2392 = scalar_lea.hbm %s5, %s2391
          %s2393 = sshll.u32 %s2382, 4
          %s2394 = int_to_ptr.vmem [resolvable:$true] %s2393
          %2399 = dma.vmem_to_hbm [thread:$0]  %s2394, 2048, %s2392, %s2379, 128, 128, 8
        $region44: #{tpu_custom_call.1} parent=39 // pred_fallthru
          _
      $region40: #{tpu_custom_call.1} parent=5 // pred_fallthru
        _
      %p2400 = scmp.le.s32.totalorder 2, %s14
      // Predicated region
      $region45: #{tpu_custom_call.1} parent=5 // pred_check
        %p2401 = pneg %p2400
      $region46: #{tpu_custom_call.1} parent=5 // pred_check_branch
        %2403 = sbr.rel (%p2401) target = $region48
      $region47: #{tpu_custom_call.1} parent=5 // pred_region
        %s2404 = ssub.s32 %s14, 2
        // Predicated region
        $region49: #{tpu_custom_call.1} parent=47 // pred_check
          %p2405 = pneg %p153
        $region50: #{tpu_custom_call.1} parent=47 // pred_check_branch
          %2407 = sbr.rel (%p2405) target = $region52
        $region51: #{tpu_custom_call.1} parent=47 // pred_region
          %s2408 = sand.u32 %s138, 1
          %s2409 = scalar_lea.sflag [#allocation3], %s2408
          %s2410 = sand.u32 %s138, 1
          %s2411 = smul.addr %s2410, 128
          %s2412 = scalar_lea.vmem [#allocation2], %s2411
          %2413 = dma.done %s2409, 2048
        $region52: #{tpu_custom_call.1} parent=47 // pred_fallthru
          _
      $region48: #{tpu_custom_call.1} parent=5 // pred_fallthru
        _
    $region6: #{tpu_custom_call.1} parent=1 // loop_footer
      %s18 = sadd.s32 1, %s14
    $region7: #{tpu_custom_call.1} parent=1 // loop_footer_branch
      %13 = sbr.rel target = $region3
    $region8: #{tpu_custom_call.1} parent=1 // loop_exit
      _
    %2414 = vsyncpa [#allocation3], 1
    %s2415 = scalar_lea.sflag [#allocation3], 1
    %2416 = vsyncpa %s2415, 1

</llo_original>
